<compile_context>
chip_gen: v6e
topology: v6e:2x2x1
jax: 0.10.0
libtpu: 0.0.40
codegen_flags: <defaults>
</compile_context>

<pallas_src>
import jax
import jax.numpy as jnp
from jax.experimental import pallas as pl
from jax.experimental.pallas import tpu as pltpu

K = 3                            # kernel_size for every conv in MotionNet
BAND = 8                         # 8-sublane-aligned im2col band per tap
BIAS_ROW = K * K * BAND          # 72: constant-1 patch row -> biases ride in the matmul
PATCH_ROWS = BIAS_ROW + 8        # 80: 9 bands + bias row + zero pad (8-aligned K dim)


# ---------------------------------- Pallas kernel ----------------------------------

def _make_kernel(img_w, c0, c1, ce):
    """Kernel factory; img_w (static) fixes the 9 tap offsets on the flattened canvas."""
    offsets = tuple(di * img_w + dj for di in range(K) for dj in range(K))

    # pvec row layout (must match prepare_params)
    sl = {}
    o = 0
    for name, n in (('a0', c0), ('tau1', c0), ('a01', c0), ('g0', c0), ('g1', c0),
                    ('li2b', c0), ('a1', c1), ('aemd', ce)):
        sl[name] = (o, o + n)
        o += n

    def kernel(x_ref, s00_ref, s01_ref, s1_ref, semd_ref,
               w0_ref, w1_ref, wemd_ref, pv_ref,
               out_ref, p_ref):
        BS = x_ref.shape[-1]  # flattened B_TILE * H * W canvas for this grid step

        # Once-per-core patch init (grid has exactly one step per TensorCore).  Rows the
        # taps never write must be finite (zero) so that zero-padded weight columns
        # can't pick up NaNs from uninitialized VMEM; row 72 is the constant-1 bias row.
        p_ref[...] = jnp.zeros_like(p_ref)
        p_ref[BIAS_ROW:BIAS_ROW + 1, :] = jnp.ones((1, BS), jnp.float32)

        def pv(name):
            a, b = sl[name]
            return pv_ref[a:b]                      # (c, 1) column, broadcast along lanes

        def conv(h, w_r):
            """Valid 3x3 conv on the flattened (C, BS) canvas: 9 lane-rolled copies into
            8-aligned patch bands -> ONE MXU matmul (DEFAULT precision, bias folded in).
            Wrapped-around / cross-batch garbage only reaches border output columns,
            which are never consumed by later stages and are cropped in the wrapper."""
            cin = h.shape[0]
            for t, off in enumerate(offsets):
                src = h if off == 0 else pltpu.roll(h, shift=BS - off, axis=1)
                p_ref[t * BAND:t * BAND + cin, :] = src
            return jnp.dot(w_r[...], p_ref[...], preferred_element_type=jnp.float32)

        # ---- conv_0 (tau0 and b0 pre-folded into weights) -> LI2 ----
        h0 = conv(x_ref[...], w0_ref)               # = tau0 * (conv0(x) + b0)
        s00 = s00_ref[...]
        s01 = s01_ref[...]
        s00n = pv('a0') * s00 + h0                              # s00 + tau0*(conv0 - s00)
        s01n = pv('a01') * s01 + pv('tau1') * s00               # uses OLD s00 (matches module)
        h = jnp.clip(s00n * pv('g0') + s01n * pv('g1') + pv('li2b'), 0.0, 1.0)

        # ---- conv_1 (li1_tau and b1 pre-folded) -> LI ----
        h1 = conv(h, w1_ref)                        # = tau1 * (conv1(h) + b1)
        s1n = pv('a1') * s1_ref[...] + h1
        h = jnp.clip(s1n, 0.0, 1.0)

        # ---- EMD stage: merged direct|shunt conv (emd_tau pre-folded) ----
        both = conv(h, wemd_ref)                    # (2*ce, BS)
        semd = semd_ref[...]
        d = both[0:ce, :]                           # = tau * (direct + b_d)
        s = both[ce:2 * ce, :]                      # = tau * (shunt  + b_s)
        semdn = d + (pv('aemd') - s) * semd         # (1-tau)*semd + tau*(direct - shunt*semd)
        y = jnp.clip(semdn, 0.0, 1.0)

        # Single tile-dense 16-row output slab (1 writeback DMA instead of 5).
        out_ref[...] = jnp.concatenate([y, s00n, s01n, s1n, semdn], axis=0)

    return kernel


# ------------------------------- one-time param packing ------------------------------

def _pack_conv(w, b, tau):
    """(Cout, Cin, 3, 3) -> (Cout, 80): column t*8 + ci = tau*w[:, ci, di, dj] with
    t = di*3 + dj (8-aligned per-tap bands, zero padded), column 72 = tau*b."""
    co, ci, kh, kw = w.shape
    w = w * tau.reshape(co, 1, 1, 1)
    b = b * tau
    wt = jnp.transpose(w, (0, 2, 3, 1)).reshape(co, kh * kw, ci)            # (co, 9, ci)
    wt = jnp.pad(wt, ((0, 0), (0, 0), (0, BAND - ci))).reshape(co, kh * kw * BAND)
    wt = jnp.pad(wt, ((0, 0), (0, PATCH_ROWS - kh * kw * BAND)))            # (co, 80)
    return wt.at[:, BIAS_ROW].set(b).astype(jnp.float32)


def prepare_params(params):
    """Hoisted out of the per-step path: fold LI/LI2/EMD taus and biases into the
    packed conv weights, merge the EMD direct|shunt convs, and coalesce the remaining
    per-channel elementwise parameters into a single (20, 1) column."""
    w0 = _pack_conv(params['conv0_w'], params['conv0_b'], params['li2_tau0'])
    w1 = _pack_conv(params['conv1_w'], params['conv1_b'], params['li1_tau'])
    wd = _pack_conv(params['convemd_w'], params['convemd_b'], params['emd_tau'])
    ws = _pack_conv(params['convshunt_w'], params['convshunt_b'], params['emd_tau'])
    pvec = jnp.concatenate([
        1.0 - params['li2_tau0'],          # a0
        params['li2_tau1'],                # tau1
        1.0 - params['li2_tau1'],          # a01
        params['li2_gate0'],               # g0
        params['li2_gate1'],               # g1
        params['li2_bias'],                # li2 bias
        1.0 - params['li1_tau'],           # a1
        1.0 - params['emd_tau'],           # aemd
    ]).reshape(-1, 1).astype(jnp.float32)
    return {'w0': w0, 'w1': w1,
            'wemd': jnp.concatenate([wd, ws], axis=0),
            'pvec': pvec}


# ------------------------------------ wrapper ---------------------------------------

def _tensorcores_per_chip():
    """Grid-sizing heuristic: v7x / v4 / v5p expose 2 TensorCores per chip through
    megacore 'parallel' grid sharding; v5e / v6e have one (fold the whole batch)."""
    try:
        kind = jax.devices()[0].device_kind.lower()
    except Exception:
        return 1
    return 2 if any(t in kind for t in ("v7", "tpu7", "v4", "v5p")) else 1


@jax.jit
def motionnet_forward(prep, x, s00, s01, s1, semd):
    """Tensor args are NCHW float32 (PyTorch convention); returns NCHW outputs."""
    N, cin, H, W = x.shape
    S = H * W
    # Never-read-border invariant (roll wrap-around, cross-batch tap bleed and the
    # zero-weight padded patch rows all rely on it): 3x3 kernels, canvas large enough
    # that the last ~2 rows of garbage sit outside every stage's valid output region.
    assert K == 3 and H >= 7 and W >= 7 and 2 * W + 2 < S, \
        "border-garbage invariant violated; revisit layout before changing shapes"

    n_tc = _tensorcores_per_chip()
    grid_n = n_tc if (N % n_tc == 0) else 1
    b_tile = N // grid_n
    BS = b_tile * S

    c0 = prep['w0'].shape[0]          # num_filters_0
    c1 = prep['w1'].shape[0]          # num_filters_1
    ce = prep['wemd'].shape[0] // 2   # num_emd
    rows = 2 * ce + 2 * c0 + c1       # 16 for the default config

    def embed(a):
        # NCHW (possibly shrunk) -> zero-padded full canvas -> lane-dense (C, N*H*W)
        n, c, h, w = a.shape
        a = jnp.pad(a, ((0, 0), (0, 0), (0, H - h), (0, W - w)))
        return jnp.transpose(a, (1, 0, 2, 3)).reshape(c, n * S)

    acts = (embed(x), embed(s00), embed(s01), embed(s1), embed(semd))
    consts = (prep['w0'], prep['w1'], prep['wemd'], prep['pvec'])

    act_spec = lambda c: pl.BlockSpec((c, BS), lambda b: (0, b))
    const_spec = lambda a: pl.BlockSpec(a.shape, lambda b: (0, 0))

    out2d = pl.pallas_call(
        _make_kernel(W, c0, c1, ce),
        grid=(grid_n,),
        out_shape=jax.ShapeDtypeStruct((rows, N * S), jnp.float32),
        in_specs=[act_spec(a.shape[0]) for a in acts] + [const_spec(a) for a in consts],
        out_specs=pl.BlockSpec((rows, BS), lambda b: (0, b)),
        scratch_shapes=[pltpu.VMEM((PATCH_ROWS, BS), jnp.float32)],
        compiler_params=pltpu.CompilerParams(dimension_semantics=("parallel",)),
    )(*acts, *consts)

    out = jnp.transpose(out2d.reshape(rows, N, H, W), (1, 0, 2, 3))
    y     = out[:, 0:ce,                         :H - 6, :W - 6]
    s00n  = out[:, ce:ce + c0,                   :H - 2, :W - 2]
    s01n  = out[:, ce + c0:ce + 2 * c0,          :H - 2, :W - 2]
    s1n   = out[:, ce + 2 * c0:ce + 2 * c0 + c1, :H - 4, :W - 4]
    semdn = out[:, ce + 2 * c0 + c1:,            :H - 6, :W - 6]
    return y, s00n, s01n, s1n, semdn


# --------------------------- plain-JAX reference (NCHW) ------------------------------

def ref_forward(params, x, s00, s01, s1, semd):
    def conv(h, w, b):
        y = jax.lax.conv_general_dilated(
            h, w, (1, 1), 'VALID', dimension_numbers=('NCHW', 'OIHW', 'NCHW'),
            precision=jax.lax.Precision.HIGHEST)
        return y + b.reshape(1, -1, 1, 1)

    def li(h, s, tau):
        sn = s + tau.reshape(1, -1, 1, 1) * (h - s)
        return jnp.clip(sn, 0.0, 1.0), sn

    h = conv(x, params['conv0_w'], params['conv0_b'])
    t0 = params['li2_tau0'].reshape(1, -1, 1, 1)
    t1 = params['li2_tau1'].reshape(1, -1, 1, 1)
    s00n = s00 + t0 * (h - s00)
    s01n = s01 + t1 * (s00 - s01)
    h = jnp.clip(s00n * params['li2_gate0'].reshape(1, -1, 1, 1)
                 + s01n * params['li2_gate1'].reshape(1, -1, 1, 1)
                 + params['li2_bias'].reshape(1, -1, 1, 1), 0.0, 1.0)
    h = conv(h, params['conv1_w'], params['conv1_b'])
    h, s1n = li(h, s1, params['li1_tau'])
    direct = conv(h, params['convemd_w'], params['convemd_b'])
    shunt = conv(h, params['convshunt_w'], params['convshunt_b'])
    h = direct + shunt * (-semd)
    h, semdn = li(h, semd, params['emd_tau'])
    return h, s00n, s01n, s1n, semdn


# -------------------------------------- main -----------------------------------------

def _make_params(key):
    """Deterministic synthetic init matching the shapes of MotionNet.__init__."""
    c_in, f0, f1, emd = 1, 2, 4, 4
    ks = jax.random.split(key, 16)

    def conv_init(k, cout, cin):
        bound = 1.0 / jnp.sqrt(cin * K * K)
        kw, kb = jax.random.split(k)
        w = jax.random.uniform(kw, (cout, cin, K, K), jnp.float32, -bound, bound)
        b = jax.random.uniform(kb, (cout,), jnp.float32, -bound, bound)
        return w, b

    w0, b0 = conv_init(ks[0], f0, c_in)
    w1, b1 = conv_init(ks[1], f1, f0)
    wemd, bemd = conv_init(ks[2], emd, f1)
    wsh, bsh = conv_init(ks[3], emd, f1)
    return {
        'conv0_w': w0, 'conv0_b': b0,
        'conv1_w': w1, 'conv1_b': b1,
        'convemd_w': wemd, 'convemd_b': bemd,
        'convshunt_w': wsh, 'convshunt_b': bsh,
        'li2_tau0': jax.random.uniform(ks[4], (f0,), jnp.float32),
        'li2_tau1': jax.random.uniform(ks[5], (f0,), jnp.float32),
        'li2_bias': jax.random.uniform(ks[6], (f0,), jnp.float32),
        'li2_gate0': jax.random.normal(ks[7], (f0,), jnp.float32),
        'li2_gate1': jax.random.normal(ks[8], (f0,), jnp.float32),
        'li1_tau': jax.random.uniform(ks[9], (f1,), jnp.float32),
        'emd_tau': jax.random.uniform(ks[10], (emd,), jnp.float32),
    }


if __name__ == "__main__":
    key = jax.random.PRNGKey(0)
    kp, kx, k00, k01, k1, kemd = jax.random.split(key, 6)

    params = _make_params(kp)
    prep = prepare_params(params)   # one-time weight packing / tau & bias folding

    N, H, W = 2, 16, 16
    x = jax.random.normal(kx, (N, 1, H, W), jnp.float32)
    state_0_0 = jax.random.uniform(k00, (N, 2, H - 2, W - 2), jnp.float32)
    state_0_1 = jax.random.uniform(k01, (N, 2, H - 2, W - 2), jnp.float32)
    state_1 = jax.random.uniform(k1, (N, 4, H - 4, W - 4), jnp.float32)
    state_emd = jax.random.uniform(kemd, (N, 4, H - 6, W - 6), jnp.float32)

    refs = ref_forward(params, x, state_0_0, state_0_1, state_1, state_emd)

    outs = motionnet_forward(prep, x, state_0_0, state_0_1, state_1, state_emd)
    outs = jax.block_until_ready(outs)

    # Kernel matmuls use DEFAULT precision (single bf16 MXU pass) while the reference
    # is exact f32 (HIGHEST), so compare within the bf16-MXU error envelope across the
    # three stacked convs.
    for o, r in zip(outs, refs):
        assert o.shape == r.shape and o.dtype == r.dtype
        err = float(jnp.abs(o - r).max())
        assert jnp.allclose(o, r, atol=2e-2, rtol=2e-2), err

    print("KERNEL_OK")
</pallas_src>

<mosaic_0001>
module attributes {stable_mosaic.version = 11 : i64} {
  func.func @kernel(%arg0: i32, %arg1: memref<1x512xf32, #tpu.memory_space<vmem>>, %arg2: memref<2x512xf32, #tpu.memory_space<vmem>>, %arg3: memref<2x512xf32, #tpu.memory_space<vmem>>, %arg4: memref<4x512xf32, #tpu.memory_space<vmem>>, %arg5: memref<4x512xf32, #tpu.memory_space<vmem>>, %arg6: memref<2x80xf32, #tpu.memory_space<vmem>>, %arg7: memref<4x80xf32, #tpu.memory_space<vmem>>, %arg8: memref<8x80xf32, #tpu.memory_space<vmem>>, %arg9: memref<20x1xf32, #tpu.memory_space<vmem>>, %arg10: memref<16x512xf32, #tpu.memory_space<vmem>>, %arg11: memref<80x512xf32, #tpu.memory_space<vmem>>) attributes {dimension_semantics = [#tpu.dimension_semantics<parallel>], iteration_bounds = array<i64: 1>, scalar_prefetch = 0 : i64, scratch_operands = 1 : i64, tpu.core_type = #tpu.core_type<tc>, window_params = [{transform_indices = @transform_0, window_bounds = array<i64: 1, 512>}, {transform_indices = @transform_1, window_bounds = array<i64: 2, 512>}, {transform_indices = @transform_2, window_bounds = array<i64: 2, 512>}, {transform_indices = @transform_3, window_bounds = array<i64: 4, 512>}, {transform_indices = @transform_4, window_bounds = array<i64: 4, 512>}, {pipeline_mode = #tpu.pipeline_mode<synchronous>, transform_indices = @transform_5, window_bounds = array<i64: 2, 80>}, {pipeline_mode = #tpu.pipeline_mode<synchronous>, transform_indices = @transform_6, window_bounds = array<i64: 4, 80>}, {pipeline_mode = #tpu.pipeline_mode<synchronous>, transform_indices = @transform_7, window_bounds = array<i64: 8, 80>}, {pipeline_mode = #tpu.pipeline_mode<synchronous>, transform_indices = @transform_8, window_bounds = array<i64: 20, 1>}, {transform_indices = @transform_9, window_bounds = array<i64: 16, 512>}]} {
    %cst = arith.constant 0.000000e+00 : f32
    %0 = vector.broadcast %cst : f32 to vector<80x512xf32>
    %c0 = arith.constant 0 : index
    %c0_0 = arith.constant 0 : index
    %1 = vector.load %arg11[%c0, %c0_0] : memref<80x512xf32, #tpu.memory_space<vmem>>, vector<80x512xf32>
    tpu.vector_store %arg11[%c0, %c0_0], %0 {strides = array<i32>} : memref<80x512xf32, #tpu.memory_space<vmem>>, vector<80x512xf32>,
    %cst_1 = arith.constant 1.000000e+00 : f32
    %2 = vector.broadcast %cst_1 : f32 to vector<1x512xf32>
    %c72 = arith.constant 72 : index
    %c0_2 = arith.constant 0 : index
    %3 = vector.load %arg11[%c72, %c0_2] : memref<80x512xf32, #tpu.memory_space<vmem>>, vector<1x512xf32>
    tpu.vector_store %arg11[%c72, %c0_2], %2 {strides = array<i32>} : memref<80x512xf32, #tpu.memory_space<vmem>>, vector<1x512xf32>,
    %c0_3 = arith.constant 0 : index
    %c0_4 = arith.constant 0 : index
    %4 = vector.load %arg1[%c0_3, %c0_4] : memref<1x512xf32, #tpu.memory_space<vmem>>, vector<1x512xf32>
    %c0_5 = arith.constant 0 : index
    %c0_6 = arith.constant 0 : index
    %5 = vector.load %arg11[%c0_5, %c0_6] : memref<80x512xf32, #tpu.memory_space<vmem>>, vector<1x512xf32>
    tpu.vector_store %arg11[%c0_5, %c0_6], %4 {strides = array<i32>} : memref<80x512xf32, #tpu.memory_space<vmem>>, vector<1x512xf32>,
    %c511_i32 = arith.constant 511 : i32
    %6 = tpu.dynamic_rotate %4 by %c511_i32 dim 1 : vector<1x512xf32>, i32 -> vector<1x512xf32>
    %c8 = arith.constant 8 : index
    %c0_7 = arith.constant 0 : index
    %7 = vector.load %arg11[%c8, %c0_7] : memref<80x512xf32, #tpu.memory_space<vmem>>, vector<1x512xf32>
    tpu.vector_store %arg11[%c8, %c0_7], %6 {strides = array<i32>} : memref<80x512xf32, #tpu.memory_space<vmem>>, vector<1x512xf32>,
    %c510_i32 = arith.constant 510 : i32
    %8 = tpu.dynamic_rotate %4 by %c510_i32 dim 1 : vector<1x512xf32>, i32 -> vector<1x512xf32>
    %c16 = arith.constant 16 : index
    %c0_8 = arith.constant 0 : index
    %9 = vector.load %arg11[%c16, %c0_8] : memref<80x512xf32, #tpu.memory_space<vmem>>, vector<1x512xf32>
    tpu.vector_store %arg11[%c16, %c0_8], %8 {strides = array<i32>} : memref<80x512xf32, #tpu.memory_space<vmem>>, vector<1x512xf32>,
    %c496_i32 = arith.constant 496 : i32
    %10 = tpu.dynamic_rotate %4 by %c496_i32 dim 1 : vector<1x512xf32>, i32 -> vector<1x512xf32>
    %c24 = arith.constant 24 : index
    %c0_9 = arith.constant 0 : index
    %11 = vector.load %arg11[%c24, %c0_9] : memref<80x512xf32, #tpu.memory_space<vmem>>, vector<1x512xf32>
    tpu.vector_store %arg11[%c24, %c0_9], %10 {strides = array<i32>} : memref<80x512xf32, #tpu.memory_space<vmem>>, vector<1x512xf32>,
    %c495_i32 = arith.constant 495 : i32
    %12 = tpu.dynamic_rotate %4 by %c495_i32 dim 1 : vector<1x512xf32>, i32 -> vector<1x512xf32>
    %c32 = arith.constant 32 : index
    %c0_10 = arith.constant 0 : index
    %13 = vector.load %arg11[%c32, %c0_10] : memref<80x512xf32, #tpu.memory_space<vmem>>, vector<1x512xf32>
    tpu.vector_store %arg11[%c32, %c0_10], %12 {strides = array<i32>} : memref<80x512xf32, #tpu.memory_space<vmem>>, vector<1x512xf32>,
    %c494_i32 = arith.constant 494 : i32
    %14 = tpu.dynamic_rotate %4 by %c494_i32 dim 1 : vector<1x512xf32>, i32 -> vector<1x512xf32>
    %c40 = arith.constant 40 : index
    %c0_11 = arith.constant 0 : index
    %15 = vector.load %arg11[%c40, %c0_11] : memref<80x512xf32, #tpu.memory_space<vmem>>, vector<1x512xf32>
    tpu.vector_store %arg11[%c40, %c0_11], %14 {strides = array<i32>} : memref<80x512xf32, #tpu.memory_space<vmem>>, vector<1x512xf32>,
    %c480_i32 = arith.constant 480 : i32
    %16 = tpu.dynamic_rotate %4 by %c480_i32 dim 1 : vector<1x512xf32>, i32 -> vector<1x512xf32>
    %c48 = arith.constant 48 : index
    %c0_12 = arith.constant 0 : index
    %17 = vector.load %arg11[%c48, %c0_12] : memref<80x512xf32, #tpu.memory_space<vmem>>, vector<1x512xf32>
    tpu.vector_store %arg11[%c48, %c0_12], %16 {strides = array<i32>} : memref<80x512xf32, #tpu.memory_space<vmem>>, vector<1x512xf32>,
    %c479_i32 = arith.constant 479 : i32
    %18 = tpu.dynamic_rotate %4 by %c479_i32 dim 1 : vector<1x512xf32>, i32 -> vector<1x512xf32>
    %c56 = arith.constant 56 : index
    %c0_13 = arith.constant 0 : index
    %19 = vector.load %arg11[%c56, %c0_13] : memref<80x512xf32, #tpu.memory_space<vmem>>, vector<1x512xf32>
    tpu.vector_store %arg11[%c56, %c0_13], %18 {strides = array<i32>} : memref<80x512xf32, #tpu.memory_space<vmem>>, vector<1x512xf32>,
    %c478_i32 = arith.constant 478 : i32
    %20 = tpu.dynamic_rotate %4 by %c478_i32 dim 1 : vector<1x512xf32>, i32 -> vector<1x512xf32>
    %c64 = arith.constant 64 : index
    %c0_14 = arith.constant 0 : index
    %21 = vector.load %arg11[%c64, %c0_14] : memref<80x512xf32, #tpu.memory_space<vmem>>, vector<1x512xf32>
    tpu.vector_store %arg11[%c64, %c0_14], %20 {strides = array<i32>} : memref<80x512xf32, #tpu.memory_space<vmem>>, vector<1x512xf32>,
    %c0_15 = arith.constant 0 : index
    %c0_16 = arith.constant 0 : index
    %22 = vector.load %arg6[%c0_15, %c0_16] : memref<2x80xf32, #tpu.memory_space<vmem>>, vector<2x80xf32>
    %c0_17 = arith.constant 0 : index
    %c0_18 = arith.constant 0 : index
    %23 = vector.load %arg11[%c0_17, %c0_18] : memref<80x512xf32, #tpu.memory_space<vmem>>, vector<80x512xf32>
    %cst_19 = arith.constant dense<0.000000e+00> : vector<2x512xf32>
    %24 = tpu.matmul %22, %23, %cst_19 {dimension_numbers = #tpu.dot_dimension_numbers<[1], [0], [0], [1], [0, 0, 1, 1], [], []>} : vector<2x80xf32>, vector<80x512xf32>, vector<2x512xf32> -> vector<2x512xf32>
    %c0_20 = arith.constant 0 : index
    %c0_21 = arith.constant 0 : index
    %25 = vector.load %arg2[%c0_20, %c0_21] : memref<2x512xf32, #tpu.memory_space<vmem>>, vector<2x512xf32>
    %c0_22 = arith.constant 0 : index
    %c0_23 = arith.constant 0 : index
    %26 = vector.load %arg3[%c0_22, %c0_23] : memref<2x512xf32, #tpu.memory_space<vmem>>, vector<2x512xf32>
    %c0_24 = arith.constant 0 : index
    %c0_25 = arith.constant 0 : index
    %27 = vector.load %arg9[%c0_24, %c0_25] : memref<20x1xf32, #tpu.memory_space<vmem>>, vector<2x1xf32>
    %28 = vector.broadcast %27 : vector<2x1xf32> to vector<2x512xf32>
    %29 = arith.mulf %28, %25 : vector<2x512xf32>
    %30 = arith.addf %29, %24 : vector<2x512xf32>
    %c4 = arith.constant 4 : index
    %c0_26 = arith.constant 0 : index
    %31 = vector.load %arg9[%c4, %c0_26] : memref<20x1xf32, #tpu.memory_space<vmem>>, vector<2x1xf32>
    %32 = vector.broadcast %31 : vector<2x1xf32> to vector<2x512xf32>
    %33 = arith.mulf %32, %26 : vector<2x512xf32>
    %c2 = arith.constant 2 : index
    %c0_27 = arith.constant 0 : index
    %34 = vector.load %arg9[%c2, %c0_27] : memref<20x1xf32, #tpu.memory_space<vmem>>, vector<2x1xf32>
    %35 = vector.broadcast %34 : vector<2x1xf32> to vector<2x512xf32>
    %36 = arith.mulf %35, %25 : vector<2x512xf32>
    %37 = arith.addf %33, %36 : vector<2x512xf32>
    %c6 = arith.constant 6 : index
    %c0_28 = arith.constant 0 : index
    %38 = vector.load %arg9[%c6, %c0_28] : memref<20x1xf32, #tpu.memory_space<vmem>>, vector<2x1xf32>
    %39 = vector.broadcast %38 : vector<2x1xf32> to vector<2x512xf32>
    %40 = arith.mulf %30, %39 : vector<2x512xf32>
    %c8_29 = arith.constant 8 : index
    %c0_30 = arith.constant 0 : index
    %41 = vector.load %arg9[%c8_29, %c0_30] : memref<20x1xf32, #tpu.memory_space<vmem>>, vector<2x1xf32>
    %42 = vector.broadcast %41 : vector<2x1xf32> to vector<2x512xf32>
    %43 = arith.mulf %37, %42 : vector<2x512xf32>
    %44 = arith.addf %40, %43 : vector<2x512xf32>
    %c10 = arith.constant 10 : index
    %c0_31 = arith.constant 0 : index
    %45 = vector.load %arg9[%c10, %c0_31] : memref<20x1xf32, #tpu.memory_space<vmem>>, vector<2x1xf32>
    %46 = vector.broadcast %45 : vector<2x1xf32> to vector<2x512xf32>
    %47 = arith.addf %44, %46 : vector<2x512xf32>
    %cst_32 = arith.constant 0.000000e+00 : f32
    %cst_33 = arith.constant 1.000000e+00 : f32
    %48 = vector.broadcast %cst_32 : f32 to vector<2x512xf32>
    %49 = arith.maximumf %48, %47 : vector<2x512xf32>
    %50 = vector.broadcast %cst_33 : f32 to vector<2x512xf32>
    %51 = arith.minimumf %50, %49 : vector<2x512xf32>
    %c0_34 = arith.constant 0 : index
    %c0_35 = arith.constant 0 : index
    %52 = vector.load %arg11[%c0_34, %c0_35] : memref<80x512xf32, #tpu.memory_space<vmem>>, vector<2x512xf32>
    tpu.vector_store %arg11[%c0_34, %c0_35], %51 {strides = array<i32>} : memref<80x512xf32, #tpu.memory_space<vmem>>, vector<2x512xf32>,
    %c511_i32_36 = arith.constant 511 : i32
    %53 = tpu.dynamic_rotate %51 by %c511_i32_36 dim 1 : vector<2x512xf32>, i32 -> vector<2x512xf32>
    %c8_37 = arith.constant 8 : index
    %c0_38 = arith.constant 0 : index
    %54 = vector.load %arg11[%c8_37, %c0_38] : memref<80x512xf32, #tpu.memory_space<vmem>>, vector<2x512xf32>
    tpu.vector_store %arg11[%c8_37, %c0_38], %53 {strides = array<i32>} : memref<80x512xf32, #tpu.memory_space<vmem>>, vector<2x512xf32>,
    %c510_i32_39 = arith.constant 510 : i32
    %55 = tpu.dynamic_rotate %51 by %c510_i32_39 dim 1 : vector<2x512xf32>, i32 -> vector<2x512xf32>
    %c16_40 = arith.constant 16 : index
    %c0_41 = arith.constant 0 : index
    %56 = vector.load %arg11[%c16_40, %c0_41] : memref<80x512xf32, #tpu.memory_space<vmem>>, vector<2x512xf32>
    tpu.vector_store %arg11[%c16_40, %c0_41], %55 {strides = array<i32>} : memref<80x512xf32, #tpu.memory_space<vmem>>, vector<2x512xf32>,
    %c496_i32_42 = arith.constant 496 : i32
    %57 = tpu.dynamic_rotate %51 by %c496_i32_42 dim 1 : vector<2x512xf32>, i32 -> vector<2x512xf32>
    %c24_43 = arith.constant 24 : index
    %c0_44 = arith.constant 0 : index
    %58 = vector.load %arg11[%c24_43, %c0_44] : memref<80x512xf32, #tpu.memory_space<vmem>>, vector<2x512xf32>
    tpu.vector_store %arg11[%c24_43, %c0_44], %57 {strides = array<i32>} : memref<80x512xf32, #tpu.memory_space<vmem>>, vector<2x512xf32>,
    %c495_i32_45 = arith.constant 495 : i32
    %59 = tpu.dynamic_rotate %51 by %c495_i32_45 dim 1 : vector<2x512xf32>, i32 -> vector<2x512xf32>
    %c32_46 = arith.constant 32 : index
    %c0_47 = arith.constant 0 : index
    %60 = vector.load %arg11[%c32_46, %c0_47] : memref<80x512xf32, #tpu.memory_space<vmem>>, vector<2x512xf32>
    tpu.vector_store %arg11[%c32_46, %c0_47], %59 {strides = array<i32>} : memref<80x512xf32, #tpu.memory_space<vmem>>, vector<2x512xf32>,
    %c494_i32_48 = arith.constant 494 : i32
    %61 = tpu.dynamic_rotate %51 by %c494_i32_48 dim 1 : vector<2x512xf32>, i32 -> vector<2x512xf32>
    %c40_49 = arith.constant 40 : index
    %c0_50 = arith.constant 0 : index
    %62 = vector.load %arg11[%c40_49, %c0_50] : memref<80x512xf32, #tpu.memory_space<vmem>>, vector<2x512xf32>
    tpu.vector_store %arg11[%c40_49, %c0_50], %61 {strides = array<i32>} : memref<80x512xf32, #tpu.memory_space<vmem>>, vector<2x512xf32>,
    %c480_i32_51 = arith.constant 480 : i32
    %63 = tpu.dynamic_rotate %51 by %c480_i32_51 dim 1 : vector<2x512xf32>, i32 -> vector<2x512xf32>
    %c48_52 = arith.constant 48 : index
    %c0_53 = arith.constant 0 : index
    %64 = vector.load %arg11[%c48_52, %c0_53] : memref<80x512xf32, #tpu.memory_space<vmem>>, vector<2x512xf32>
    tpu.vector_store %arg11[%c48_52, %c0_53], %63 {strides = array<i32>} : memref<80x512xf32, #tpu.memory_space<vmem>>, vector<2x512xf32>,
    %c479_i32_54 = arith.constant 479 : i32
    %65 = tpu.dynamic_rotate %51 by %c479_i32_54 dim 1 : vector<2x512xf32>, i32 -> vector<2x512xf32>
    %c56_55 = arith.constant 56 : index
    %c0_56 = arith.constant 0 : index
    %66 = vector.load %arg11[%c56_55, %c0_56] : memref<80x512xf32, #tpu.memory_space<vmem>>, vector<2x512xf32>
    tpu.vector_store %arg11[%c56_55, %c0_56], %65 {strides = array<i32>} : memref<80x512xf32, #tpu.memory_space<vmem>>, vector<2x512xf32>,
    %c478_i32_57 = arith.constant 478 : i32
    %67 = tpu.dynamic_rotate %51 by %c478_i32_57 dim 1 : vector<2x512xf32>, i32 -> vector<2x512xf32>
    %c64_58 = arith.constant 64 : index
    %c0_59 = arith.constant 0 : index
    %68 = vector.load %arg11[%c64_58, %c0_59] : memref<80x512xf32, #tpu.memory_space<vmem>>, vector<2x512xf32>
    tpu.vector_store %arg11[%c64_58, %c0_59], %67 {strides = array<i32>} : memref<80x512xf32, #tpu.memory_space<vmem>>, vector<2x512xf32>,
    %c0_60 = arith.constant 0 : index
    %c0_61 = arith.constant 0 : index
    %69 = vector.load %arg7[%c0_60, %c0_61] : memref<4x80xf32, #tpu.memory_space<vmem>>, vector<4x80xf32>
    %c0_62 = arith.constant 0 : index
    %c0_63 = arith.constant 0 : index
    %70 = vector.load %arg11[%c0_62, %c0_63] : memref<80x512xf32, #tpu.memory_space<vmem>>, vector<80x512xf32>
    %cst_64 = arith.constant dense<0.000000e+00> : vector<4x512xf32>
    %71 = tpu.matmul %69, %70, %cst_64 {dimension_numbers = #tpu.dot_dimension_numbers<[1], [0], [0], [1], [0, 0, 1, 1], [], []>} : vector<4x80xf32>, vector<80x512xf32>, vector<4x512xf32> -> vector<4x512xf32>
    %c12 = arith.constant 12 : index
    %c0_65 = arith.constant 0 : index
    %72 = vector.load %arg9[%c12, %c0_65] : memref<20x1xf32, #tpu.memory_space<vmem>>, vector<4x1xf32>
    %c0_66 = arith.constant 0 : index
    %c0_67 = arith.constant 0 : index
    %73 = vector.load %arg4[%c0_66, %c0_67] : memref<4x512xf32, #tpu.memory_space<vmem>>, vector<4x512xf32>
    %74 = vector.broadcast %72 : vector<4x1xf32> to vector<4x512xf32>
    %75 = arith.mulf %74, %73 : vector<4x512xf32>
    %76 = arith.addf %75, %71 : vector<4x512xf32>
    %cst_68 = arith.constant 0.000000e+00 : f32
    %cst_69 = arith.constant 1.000000e+00 : f32
    %77 = vector.broadcast %cst_68 : f32 to vector<4x512xf32>
    %78 = arith.maximumf %77, %76 : vector<4x512xf32>
    %79 = vector.broadcast %cst_69 : f32 to vector<4x512xf32>
    %80 = arith.minimumf %79, %78 : vector<4x512xf32>
    %c0_70 = arith.constant 0 : index
    %c0_71 = arith.constant 0 : index
    %81 = vector.load %arg11[%c0_70, %c0_71] : memref<80x512xf32, #tpu.memory_space<vmem>>, vector<4x512xf32>
    tpu.vector_store %arg11[%c0_70, %c0_71], %80 {strides = array<i32>} : memref<80x512xf32, #tpu.memory_space<vmem>>, vector<4x512xf32>,
    %c511_i32_72 = arith.constant 511 : i32
    %82 = tpu.dynamic_rotate %80 by %c511_i32_72 dim 1 : vector<4x512xf32>, i32 -> vector<4x512xf32>
    %c8_73 = arith.constant 8 : index
    %c0_74 = arith.constant 0 : index
    %83 = vector.load %arg11[%c8_73, %c0_74] : memref<80x512xf32, #tpu.memory_space<vmem>>, vector<4x512xf32>
    tpu.vector_store %arg11[%c8_73, %c0_74], %82 {strides = array<i32>} : memref<80x512xf32, #tpu.memory_space<vmem>>, vector<4x512xf32>,
    %c510_i32_75 = arith.constant 510 : i32
    %84 = tpu.dynamic_rotate %80 by %c510_i32_75 dim 1 : vector<4x512xf32>, i32 -> vector<4x512xf32>
    %c16_76 = arith.constant 16 : index
    %c0_77 = arith.constant 0 : index
    %85 = vector.load %arg11[%c16_76, %c0_77] : memref<80x512xf32, #tpu.memory_space<vmem>>, vector<4x512xf32>
    tpu.vector_store %arg11[%c16_76, %c0_77], %84 {strides = array<i32>} : memref<80x512xf32, #tpu.memory_space<vmem>>, vector<4x512xf32>,
    %c496_i32_78 = arith.constant 496 : i32
    %86 = tpu.dynamic_rotate %80 by %c496_i32_78 dim 1 : vector<4x512xf32>, i32 -> vector<4x512xf32>
    %c24_79 = arith.constant 24 : index
    %c0_80 = arith.constant 0 : index
    %87 = vector.load %arg11[%c24_79, %c0_80] : memref<80x512xf32, #tpu.memory_space<vmem>>, vector<4x512xf32>
    tpu.vector_store %arg11[%c24_79, %c0_80], %86 {strides = array<i32>} : memref<80x512xf32, #tpu.memory_space<vmem>>, vector<4x512xf32>,
    %c495_i32_81 = arith.constant 495 : i32
    %88 = tpu.dynamic_rotate %80 by %c495_i32_81 dim 1 : vector<4x512xf32>, i32 -> vector<4x512xf32>
    %c32_82 = arith.constant 32 : index
    %c0_83 = arith.constant 0 : index
    %89 = vector.load %arg11[%c32_82, %c0_83] : memref<80x512xf32, #tpu.memory_space<vmem>>, vector<4x512xf32>
    tpu.vector_store %arg11[%c32_82, %c0_83], %88 {strides = array<i32>} : memref<80x512xf32, #tpu.memory_space<vmem>>, vector<4x512xf32>,
    %c494_i32_84 = arith.constant 494 : i32
    %90 = tpu.dynamic_rotate %80 by %c494_i32_84 dim 1 : vector<4x512xf32>, i32 -> vector<4x512xf32>
    %c40_85 = arith.constant 40 : index
    %c0_86 = arith.constant 0 : index
    %91 = vector.load %arg11[%c40_85, %c0_86] : memref<80x512xf32, #tpu.memory_space<vmem>>, vector<4x512xf32>
    tpu.vector_store %arg11[%c40_85, %c0_86], %90 {strides = array<i32>} : memref<80x512xf32, #tpu.memory_space<vmem>>, vector<4x512xf32>,
    %c480_i32_87 = arith.constant 480 : i32
    %92 = tpu.dynamic_rotate %80 by %c480_i32_87 dim 1 : vector<4x512xf32>, i32 -> vector<4x512xf32>
    %c48_88 = arith.constant 48 : index
    %c0_89 = arith.constant 0 : index
    %93 = vector.load %arg11[%c48_88, %c0_89] : memref<80x512xf32, #tpu.memory_space<vmem>>, vector<4x512xf32>
    tpu.vector_store %arg11[%c48_88, %c0_89], %92 {strides = array<i32>} : memref<80x512xf32, #tpu.memory_space<vmem>>, vector<4x512xf32>,
    %c479_i32_90 = arith.constant 479 : i32
    %94 = tpu.dynamic_rotate %80 by %c479_i32_90 dim 1 : vector<4x512xf32>, i32 -> vector<4x512xf32>
    %c56_91 = arith.constant 56 : index
    %c0_92 = arith.constant 0 : index
    %95 = vector.load %arg11[%c56_91, %c0_92] : memref<80x512xf32, #tpu.memory_space<vmem>>, vector<4x512xf32>
    tpu.vector_store %arg11[%c56_91, %c0_92], %94 {strides = array<i32>} : memref<80x512xf32, #tpu.memory_space<vmem>>, vector<4x512xf32>,
    %c478_i32_93 = arith.constant 478 : i32
    %96 = tpu.dynamic_rotate %80 by %c478_i32_93 dim 1 : vector<4x512xf32>, i32 -> vector<4x512xf32>
    %c64_94 = arith.constant 64 : index
    %c0_95 = arith.constant 0 : index
    %97 = vector.load %arg11[%c64_94, %c0_95] : memref<80x512xf32, #tpu.memory_space<vmem>>, vector<4x512xf32>
    tpu.vector_store %arg11[%c64_94, %c0_95], %96 {strides = array<i32>} : memref<80x512xf32, #tpu.memory_space<vmem>>, vector<4x512xf32>,
    %c0_96 = arith.constant 0 : index
    %c0_97 = arith.constant 0 : index
    %98 = vector.load %arg8[%c0_96, %c0_97] : memref<8x80xf32, #tpu.memory_space<vmem>>, vector<8x80xf32>
    %c0_98 = arith.constant 0 : index
    %c0_99 = arith.constant 0 : index
    %99 = vector.load %arg11[%c0_98, %c0_99] : memref<80x512xf32, #tpu.memory_space<vmem>>, vector<80x512xf32>
    %cst_100 = arith.constant dense<0.000000e+00> : vector<8x512xf32>
    %100 = tpu.matmul %98, %99, %cst_100 {dimension_numbers = #tpu.dot_dimension_numbers<[1], [0], [0], [1], [0, 0, 1, 1], [], []>} : vector<8x80xf32>, vector<80x512xf32>, vector<8x512xf32> -> vector<8x512xf32>
    %c0_101 = arith.constant 0 : index
    %c0_102 = arith.constant 0 : index
    %101 = vector.load %arg5[%c0_101, %c0_102] : memref<4x512xf32, #tpu.memory_space<vmem>>, vector<4x512xf32>
    %102 = vector.extract_strided_slice %100 {offsets = [0, 0], sizes = [4, 512], strides = [1, 1]} : vector<8x512xf32> to vector<4x512xf32>
    %103 = vector.extract_strided_slice %100 {offsets = [4, 0], sizes = [4, 512], strides = [1, 1]} : vector<8x512xf32> to vector<4x512xf32>
    %c16_103 = arith.constant 16 : index
    %c0_104 = arith.constant 0 : index
    %104 = vector.load %arg9[%c16_103, %c0_104] : memref<20x1xf32, #tpu.memory_space<vmem>>, vector<4x1xf32>
    %105 = vector.broadcast %104 : vector<4x1xf32> to vector<4x512xf32>
    %106 = arith.subf %105, %103 : vector<4x512xf32>
    %107 = arith.mulf %106, %101 : vector<4x512xf32>
    %108 = arith.addf %102, %107 : vector<4x512xf32>
    %cst_105 = arith.constant 0.000000e+00 : f32
    %cst_106 = arith.constant 1.000000e+00 : f32
    %109 = vector.broadcast %cst_105 : f32 to vector<4x512xf32>
    %110 = arith.maximumf %109, %108 : vector<4x512xf32>
    %111 = vector.broadcast %cst_106 : f32 to vector<4x512xf32>
    %112 = arith.minimumf %111, %110 : vector<4x512xf32>
    %113 = tpu.concatenate %112, %30, %37, %76, %108 in 0 : vector<4x512xf32>, vector<2x512xf32>, vector<2x512xf32>, vector<4x512xf32>, vector<4x512xf32> -> vector<16x512xf32>
    %c0_107 = arith.constant 0 : index
    %c0_108 = arith.constant 0 : index
    %114 = vector.load %arg10[%c0_107, %c0_108] : memref<16x512xf32, #tpu.memory_space<vmem>>, vector<16x512xf32>
    tpu.vector_store %arg10[%c0_107, %c0_108], %113 {strides = array<i32>} : memref<16x512xf32, #tpu.memory_space<vmem>>, vector<16x512xf32>,
    return
  }
  func.func @transform_0(%arg0: i32) -> (i32, i32) {
    %c0_i32 = arith.constant 0 : i32
    %c0_i32_0 = arith.constant 0 : i32
    return %c0_i32, %arg0 : i32, i32
  }
  func.func @transform_1(%arg0: i32) -> (i32, i32) {
    %c0_i32 = arith.constant 0 : i32
    %c0_i32_0 = arith.constant 0 : i32
    return %c0_i32, %arg0 : i32, i32
  }
  func.func @transform_2(%arg0: i32) -> (i32, i32) {
    %c0_i32 = arith.constant 0 : i32
    %c0_i32_0 = arith.constant 0 : i32
    return %c0_i32, %arg0 : i32, i32
  }
  func.func @transform_3(%arg0: i32) -> (i32, i32) {
    %c0_i32 = arith.constant 0 : i32
    %c0_i32_0 = arith.constant 0 : i32
    return %c0_i32, %arg0 : i32, i32
  }
  func.func @transform_4(%arg0: i32) -> (i32, i32) {
    %c0_i32 = arith.constant 0 : i32
    %c0_i32_0 = arith.constant 0 : i32
    return %c0_i32, %arg0 : i32, i32
  }
  func.func @transform_5(%arg0: i32) -> (i32, i32) {
    %c0_i32 = arith.constant 0 : i32
    %c0_i32_0 = arith.constant 0 : i32
    %c0_i32_1 = arith.constant 0 : i32
    return %c0_i32, %c0_i32_0 : i32, i32
  }
  func.func @transform_6(%arg0: i32) -> (i32, i32) {
    %c0_i32 = arith.constant 0 : i32
    %c0_i32_0 = arith.constant 0 : i32
    %c0_i32_1 = arith.constant 0 : i32
    return %c0_i32, %c0_i32_0 : i32, i32
  }
  func.func @transform_7(%arg0: i32) -> (i32, i32) {
    %c0_i32 = arith.constant 0 : i32
    %c0_i32_0 = arith.constant 0 : i32
    %c0_i32_1 = arith.constant 0 : i32
    return %c0_i32, %c0_i32_0 : i32, i32
  }
  func.func @transform_8(%arg0: i32) -> (i32, i32) {
    %c0_i32 = arith.constant 0 : i32
    %c0_i32_0 = arith.constant 0 : i32
    %c0_i32_1 = arith.constant 0 : i32
    return %c0_i32, %c0_i32_0 : i32, i32
  }
  func.func @transform_9(%arg0: i32) -> (i32, i32) {
    %c0_i32 = arith.constant 0 : i32
    %c0_i32_0 = arith.constant 0 : i32
    return %c0_i32, %arg0 : i32, i32
  }
}

</mosaic_0001>

<llo_original>
// kernel: motionnet_forward.1
$region0: #{motionnet_forward.1}
  #allocation0 [shape = 'u32[]', space=smem, size = 0x4, offset = 0x4, fixed_abs, tag = 'smem constant byte address 0x4 - core index']
  #allocation1 [shape = 'u32[144,128]{1,0:T(1,128)}', space=vmem, size = 0x12000, scoped, tag = 'internal scratch']
  #allocation2 [shape = 'f32[80,512]{1,0:T(8,128)}', space=vmem, size = 0x28000, scoped, tag = 'scratch operand']
  %s0 = inlined_call_operand.vmem [shape: f32[1,512], index: 0, kind: input, shape index: {}]
  %s1 = inlined_call_operand.vmem [shape: f32[2,512], index: 1, kind: input, shape index: {}]
  %s2 = inlined_call_operand.vmem [shape: f32[2,512], index: 2, kind: input, shape index: {}]
  %s3 = inlined_call_operand.vmem [shape: f32[4,512], index: 3, kind: input, shape index: {}]
  %s4 = inlined_call_operand.vmem [shape: f32[4,512], index: 4, kind: input, shape index: {}]
  %s5 = inlined_call_operand.vmem [shape: f32[2,80], index: 5, kind: input, shape index: {}]
  %s6 = inlined_call_operand.vmem [shape: f32[4,80], index: 6, kind: input, shape index: {}]
  %s7 = inlined_call_operand.vmem [shape: f32[8,80], index: 7, kind: input, shape index: {}]
  %s8 = inlined_call_operand.vmem [shape: f32[20,1], index: 8, kind: input, shape index: {}]
  %s9 = inlined_call_operand.vmem [shape: f32[16,512], index: 9, kind: output, shape index: {}]
  %s10 = sld [smem:[#allocation0]]
  $region46: #{motionnet_forward.1} parent=0
    _
  %s12 = ssub.s32 1, %s10
  %s13 = scalar_select 0, %s12, %s10
  // Predicated region
  $region2: #{motionnet_forward.1} parent=0 // pred_check
    _
  $region3: #{motionnet_forward.1} parent=0 // pred_check_branch
    %15 = sbr.rel (0) target = $region5
  $region4: #{motionnet_forward.1} parent=0 // pred_region
    _
  $region5: #{motionnet_forward.1} parent=0 // pred_fallthru
    _
  // Predicated region
  $region6: #{motionnet_forward.1} parent=0 // pred_check
    _
  $region7: #{motionnet_forward.1} parent=0 // pred_check_branch
    %17 = sbr.rel (0) target = $region9
  $region8: #{motionnet_forward.1} parent=0 // pred_region
    _
  $region9: #{motionnet_forward.1} parent=0 // pred_fallthru
    _
  // Predicated region
  $region10: #{motionnet_forward.1} parent=0 // pred_check
    _
  $region11: #{motionnet_forward.1} parent=0 // pred_check_branch
    %19 = sbr.rel (0) target = $region13
  $region12: #{motionnet_forward.1} parent=0 // pred_region
    _
  $region13: #{motionnet_forward.1} parent=0 // pred_fallthru
    _
  // Predicated region
  $region14: #{motionnet_forward.1} parent=0 // pred_check
    _
  $region15: #{motionnet_forward.1} parent=0 // pred_check_branch
    %21 = sbr.rel (0) target = $region17
  $region16: #{motionnet_forward.1} parent=0 // pred_region
    _
  $region17: #{motionnet_forward.1} parent=0 // pred_fallthru
    _
  // Predicated region
  $region18: #{motionnet_forward.1} parent=0 // pred_check
    _
  $region19: #{motionnet_forward.1} parent=0 // pred_check_branch
    %23 = sbr.rel (0) target = $region21
  $region20: #{motionnet_forward.1} parent=0 // pred_region
    _
  $region21: #{motionnet_forward.1} parent=0 // pred_fallthru
    _
  // Predicated region
  $region22: #{motionnet_forward.1} parent=0 // pred_check
    _
  $region23: #{motionnet_forward.1} parent=0 // pred_check_branch
    %25 = sbr.rel (0) target = $region25
  $region24: #{motionnet_forward.1} parent=0 // pred_region
    _
  $region25: #{motionnet_forward.1} parent=0 // pred_fallthru
    _
  // Predicated region
  $region26: #{motionnet_forward.1} parent=0 // pred_check
    _
  $region27: #{motionnet_forward.1} parent=0 // pred_check_branch
    %27 = sbr.rel (0) target = $region29
  $region28: #{motionnet_forward.1} parent=0 // pred_region
    _
  $region29: #{motionnet_forward.1} parent=0 // pred_fallthru
    _
  // Predicated region
  $region30: #{motionnet_forward.1} parent=0 // pred_check
    _
  $region31: #{motionnet_forward.1} parent=0 // pred_check_branch
    %29 = sbr.rel (0) target = $region33
  $region32: #{motionnet_forward.1} parent=0 // pred_region
    _
  $region33: #{motionnet_forward.1} parent=0 // pred_fallthru
    _
  // Predicated region
  $region34: #{motionnet_forward.1} parent=0 // pred_check
    _
  $region35: #{motionnet_forward.1} parent=0 // pred_check_branch
    %31 = sbr.rel (0) target = $region37
  $region36: #{motionnet_forward.1} parent=0 // pred_region
    _
  $region37: #{motionnet_forward.1} parent=0 // pred_fallthru
    _
  %32 = vst [vmem:[#allocation2] sm:$0xff] 0.0
  %33 = vst [vmem:[#allocation2 + $0x8] sm:$0xff] 0.0
  %34 = vst [vmem:[#allocation2 + $0x10] sm:$0xff] 0.0
  %35 = vst [vmem:[#allocation2 + $0x18] sm:$0xff] 0.0
  %36 = vst [vmem:[#allocation2 + $0x20] sm:$0xff] 0.0
  %37 = vst [vmem:[#allocation2 + $0x28] sm:$0xff] 0.0
  %38 = vst [vmem:[#allocation2 + $0x30] sm:$0xff] 0.0
  %39 = vst [vmem:[#allocation2 + $0x38] sm:$0xff] 0.0
  %40 = vst [vmem:[#allocation2 + $0x40] sm:$0xff] 0.0
  %41 = vst [vmem:[#allocation2 + $0x48] sm:$0xff] 0.0
  %42 = vst [vmem:[#allocation2 + $0x50] sm:$0xff] 0.0
  %43 = vst [vmem:[#allocation2 + $0x58] sm:$0xff] 0.0
  %44 = vst [vmem:[#allocation2 + $0x60] sm:$0xff] 0.0
  %45 = vst [vmem:[#allocation2 + $0x68] sm:$0xff] 0.0
  %46 = vst [vmem:[#allocation2 + $0x70] sm:$0xff] 0.0
  %47 = vst [vmem:[#allocation2 + $0x78] sm:$0xff] 0.0
  %48 = vst [vmem:[#allocation2 + $0x80] sm:$0xff] 0.0
  %49 = vst [vmem:[#allocation2 + $0x88] sm:$0xff] 0.0
  %50 = vst [vmem:[#allocation2 + $0x90] sm:$0xff] 0.0
  %51 = vst [vmem:[#allocation2 + $0x98] sm:$0xff] 0.0
  %52 = vst [vmem:[#allocation2 + $0xa0] sm:$0xff] 0.0
  %53 = vst [vmem:[#allocation2 + $0xa8] sm:$0xff] 0.0
  %54 = vst [vmem:[#allocation2 + $0xb0] sm:$0xff] 0.0
  %55 = vst [vmem:[#allocation2 + $0xb8] sm:$0xff] 0.0
  %56 = vst [vmem:[#allocation2 + $0xc0] sm:$0xff] 0.0
  %57 = vst [vmem:[#allocation2 + $0xc8] sm:$0xff] 0.0
  %58 = vst [vmem:[#allocation2 + $0xd0] sm:$0xff] 0.0
  %59 = vst [vmem:[#allocation2 + $0xd8] sm:$0xff] 0.0
  %60 = vst [vmem:[#allocation2 + $0xe0] sm:$0xff] 0.0
  %61 = vst [vmem:[#allocation2 + $0xe8] sm:$0xff] 0.0
  %62 = vst [vmem:[#allocation2 + $0xf0] sm:$0xff] 0.0
  %63 = vst [vmem:[#allocation2 + $0xf8] sm:$0xff] 0.0
  %64 = vst [vmem:[#allocation2 + $0x100] sm:$0xff] 0.0
  %65 = vst [vmem:[#allocation2 + $0x108] sm:$0xff] 0.0
  %66 = vst [vmem:[#allocation2 + $0x110] sm:$0xff] 0.0
  %67 = vst [vmem:[#allocation2 + $0x118] sm:$0xff] 0.0
  %68 = vst [vmem:[#allocation2 + $0x120] sm:$0xff] 0.0
  %69 = vst [vmem:[#allocation2 + $0x128] sm:$0xff] 0.0
  %70 = vst [vmem:[#allocation2 + $0x130] sm:$0xff] 0.0
  %71 = vst [vmem:[#allocation2 + $0x138] sm:$0xff] 0.0
  %v72 = vlaneseq
  %vm73 = vcmp.ge.s32.totalorder %v72, 0
  %vm74 = vcmp.lt.s32.totalorder %v72, 512
  %vm75 = vmand %vm73, %vm74
  %s76 = scalar_lea.vmem [#allocation2], 288
  %77 = vst.msk [vmem:[%s76] ss:$8 sm:$0xf] %vm75, 1.0
  %78 = vst.msk [vmem:[%s76] ss:$8 sm:$0x0] %vm75, 1.0
  %v79 = vld [vmem:[%s0] sm:$0xf]
  %80 = vst.msk [vmem:[#allocation2] ss:$8 sm:$0xf] %vm75, %v79
  %81 = vst.msk [vmem:[#allocation2] ss:$8 sm:$0x0] %vm75, %v79
  %v83 = vlaneseq
  %v84 = vshrl.u32 %v83, 7
  %v85 = vsub.s32 0, %v84
  %v86 = vrot.slane %v79, %v85
  %v87 = vlaneseq
  %v88 = vshrl.u32 %v87, 7
  %v89 = vsub.s32 1, %v88
  %v90 = vrot.slane %v79, %v89
  %v91 = vlaneseq
  %v92 = vshrl.u32 %v91, 7
  %v93 = vsub.s32 2, %v92
  %v94 = vrot.slane %v79, %v93
  %v95 = vlaneseq
  %v96 = vshrl.u32 %v95, 7
  %v97 = vsub.s32 3, %v96
  %v98 = vrot.slane %v79, %v97
  %103 = vrot.lane.b32.xlu0 %v86, 127
  %v104 = vpop.permute.xlu0 %103
  %105 = vrot.lane.b32.xlu0 %v90, 127
  %v106 = vpop.permute.xlu0 %105
  %107 = vrot.lane.b32.xlu0 %v94, 127
  %v108 = vpop.permute.xlu0 %107
  %109 = vrot.lane.b32.xlu0 %v98, 127
  %v110 = vpop.permute.xlu0 %109
  %v111 = vlaneseq
  %v112 = vand.u32 %v111, 127
  %vm113 = vcmp.lt.s32.totalorder %v112, 127
  %v114 = vsel %vm113, %v108, %v110
  %v115 = vsel %vm113, %v106, %v108
  %v116 = vsel %vm113, %v104, %v106
  %v117 = vsel %vm113, %v110, %v104
  %v122 = vcombine.low %v116, %v115
  %v123 = vcombine.low %v114, %v117
  %v125 = vunpack.c.l.s4 1966171168
  %v126 = vunpack.c.0.s8 %v125
  %v127 = vlaneseq
  %v128 = vshrl.u32 %v127, 7
  %v129 = vsub.s32 %v126, %v128
  %v130 = vrot.slane %v122, %v129
  %v132 = vunpack.c.l.s4 1966171168
  %v133 = vunpack.c.0.s8 %v132
  %v134 = vlaneseq
  %v135 = vshrl.u32 %v134, 7
  %v136 = vsub.s32 %v133, %v135
  %v137 = vrot.slane %v123, %v136
  %v138 = vcombine.low %v130, %v137
  %v140 = vunpack.c.l.s4 1966171168
  %v141 = vunpack.c.0.s8 %v140
  %v142 = vlaneseq
  %v143 = vshrl.u32 %v142, 7
  %v144 = vsub.s32 %v141, %v143
  %v145 = vrot.slane %v138, %v144
  %s147 = scalar_lea.vmem [#allocation2], 32
  %148 = vst.msk [vmem:[%s147] ss:$8 sm:$0xf] %vm75, %v145
  %149 = vst.msk [vmem:[%s147] ss:$8 sm:$0x0] %vm75, %v145
  %150 = vrot.lane.b32.xlu0 %v86, 126
  %v151 = vpop.permute.xlu0 %150
  %152 = vrot.lane.b32.xlu0 %v90, 126
  %v153 = vpop.permute.xlu0 %152
  %154 = vrot.lane.b32.xlu0 %v94, 126
  %v155 = vpop.permute.xlu0 %154
  %156 = vrot.lane.b32.xlu0 %v98, 126
  %v157 = vpop.permute.xlu0 %156
  %vm158 = vcmp.lt.s32.totalorder %v112, 126
  %v159 = vsel %vm158, %v155, %v157
  %v160 = vsel %vm158, %v153, %v155
  %v161 = vsel %vm158, %v151, %v153
  %v162 = vsel %vm158, %v157, %v151
  %v167 = vcombine.low %v161, %v160
  %v168 = vcombine.low %v159, %v162
  %v170 = vunpack.c.l.s4 1966171168
  %v171 = vunpack.c.0.s8 %v170
  %v172 = vlaneseq
  %v173 = vshrl.u32 %v172, 7
  %v174 = vsub.s32 %v171, %v173
  %v175 = vrot.slane %v167, %v174
  %v177 = vunpack.c.l.s4 1966171168
  %v178 = vunpack.c.0.s8 %v177
  %v179 = vlaneseq
  %v180 = vshrl.u32 %v179, 7
  %v181 = vsub.s32 %v178, %v180
  %v182 = vrot.slane %v168, %v181
  %v183 = vcombine.low %v175, %v182
  %v185 = vunpack.c.l.s4 1966171168
  %v186 = vunpack.c.0.s8 %v185
  %v187 = vlaneseq
  %v188 = vshrl.u32 %v187, 7
  %v189 = vsub.s32 %v186, %v188
  %v190 = vrot.slane %v183, %v189
  %s192 = scalar_lea.vmem [#allocation2], 64
  %193 = vst.msk [vmem:[%s192] ss:$8 sm:$0xf] %vm75, %v190
  %194 = vst.msk [vmem:[%s192] ss:$8 sm:$0x0] %vm75, %v190
  %195 = vrot.lane.b32.xlu0 %v86, 112
  %v196 = vpop.permute.xlu0 %195
  %197 = vrot.lane.b32.xlu0 %v90, 112
  %v198 = vpop.permute.xlu0 %197
  %199 = vrot.lane.b32.xlu0 %v94, 112
  %v200 = vpop.permute.xlu0 %199
  %201 = vrot.lane.b32.xlu0 %v98, 112
  %v202 = vpop.permute.xlu0 %201
  %vm203 = vcmp.lt.s32.totalorder %v112, 112
  %v204 = vsel %vm203, %v200, %v202
  %v205 = vsel %vm203, %v198, %v200
  %v206 = vsel %vm203, %v196, %v198
  %v207 = vsel %vm203, %v202, %v196
  %v212 = vcombine.low %v206, %v205
  %v213 = vcombine.low %v204, %v207
  %v215 = vunpack.c.l.s4 1966171168
  %v216 = vunpack.c.0.s8 %v215
  %v217 = vlaneseq
  %v218 = vshrl.u32 %v217, 7
  %v219 = vsub.s32 %v216, %v218
  %v220 = vrot.slane %v212, %v219
  %v222 = vunpack.c.l.s4 1966171168
  %v223 = vunpack.c.0.s8 %v222
  %v224 = vlaneseq
  %v225 = vshrl.u32 %v224, 7
  %v226 = vsub.s32 %v223, %v225
  %v227 = vrot.slane %v213, %v226
  %v228 = vcombine.low %v220, %v227
  %v230 = vunpack.c.l.s4 1966171168
  %v231 = vunpack.c.0.s8 %v230
  %v232 = vlaneseq
  %v233 = vshrl.u32 %v232, 7
  %v234 = vsub.s32 %v231, %v233
  %v235 = vrot.slane %v228, %v234
  %s237 = scalar_lea.vmem [#allocation2], 96
  %238 = vst.msk [vmem:[%s237] ss:$8 sm:$0xf] %vm75, %v235
  %239 = vst.msk [vmem:[%s237] ss:$8 sm:$0x0] %vm75, %v235
  %240 = vrot.lane.b32.xlu0 %v86, 111
  %v241 = vpop.permute.xlu0 %240
  %242 = vrot.lane.b32.xlu0 %v90, 111
  %v243 = vpop.permute.xlu0 %242
  %244 = vrot.lane.b32.xlu0 %v94, 111
  %v245 = vpop.permute.xlu0 %244
  %246 = vrot.lane.b32.xlu0 %v98, 111
  %v247 = vpop.permute.xlu0 %246
  %vm248 = vcmp.lt.s32.totalorder %v112, 111
  %v249 = vsel %vm248, %v245, %v247
  %v250 = vsel %vm248, %v243, %v245
  %v251 = vsel %vm248, %v241, %v243
  %v252 = vsel %vm248, %v247, %v241
  %v257 = vcombine.low %v251, %v250
  %v258 = vcombine.low %v249, %v252
  %v260 = vunpack.c.l.s4 1966171168
  %v261 = vunpack.c.0.s8 %v260
  %v262 = vlaneseq
  %v263 = vshrl.u32 %v262, 7
  %v264 = vsub.s32 %v261, %v263
  %v265 = vrot.slane %v257, %v264
  %v267 = vunpack.c.l.s4 1966171168
  %v268 = vunpack.c.0.s8 %v267
  %v269 = vlaneseq
  %v270 = vshrl.u32 %v269, 7
  %v271 = vsub.s32 %v268, %v270
  %v272 = vrot.slane %v258, %v271
  %v273 = vcombine.low %v265, %v272
  %v275 = vunpack.c.l.s4 1966171168
  %v276 = vunpack.c.0.s8 %v275
  %v277 = vlaneseq
  %v278 = vshrl.u32 %v277, 7
  %v279 = vsub.s32 %v276, %v278
  %v280 = vrot.slane %v273, %v279
  %s282 = scalar_lea.vmem [#allocation2], 128
  %283 = vst.msk [vmem:[%s282] ss:$8 sm:$0xf] %vm75, %v280
  %284 = vst.msk [vmem:[%s282] ss:$8 sm:$0x0] %vm75, %v280
  %285 = vrot.lane.b32.xlu0 %v86, 110
  %v286 = vpop.permute.xlu0 %285
  %287 = vrot.lane.b32.xlu0 %v90, 110
  %v288 = vpop.permute.xlu0 %287
  %289 = vrot.lane.b32.xlu0 %v94, 110
  %v290 = vpop.permute.xlu0 %289
  %291 = vrot.lane.b32.xlu0 %v98, 110
  %v292 = vpop.permute.xlu0 %291
  %vm293 = vcmp.lt.s32.totalorder %v112, 110
  %v294 = vsel %vm293, %v290, %v292
  %v295 = vsel %vm293, %v288, %v290
  %v296 = vsel %vm293, %v286, %v288
  %v297 = vsel %vm293, %v292, %v286
  %v302 = vcombine.low %v296, %v295
  %v303 = vcombine.low %v294, %v297
  %v305 = vunpack.c.l.s4 1966171168
  %v306 = vunpack.c.0.s8 %v305
  %v307 = vlaneseq
  %v308 = vshrl.u32 %v307, 7
  %v309 = vsub.s32 %v306, %v308
  %v310 = vrot.slane %v302, %v309
  %v312 = vunpack.c.l.s4 1966171168
  %v313 = vunpack.c.0.s8 %v312
  %v314 = vlaneseq
  %v315 = vshrl.u32 %v314, 7
  %v316 = vsub.s32 %v313, %v315
  %v317 = vrot.slane %v303, %v316
  %v318 = vcombine.low %v310, %v317
  %v320 = vunpack.c.l.s4 1966171168
  %v321 = vunpack.c.0.s8 %v320
  %v322 = vlaneseq
  %v323 = vshrl.u32 %v322, 7
  %v324 = vsub.s32 %v321, %v323
  %v325 = vrot.slane %v318, %v324
  %s327 = scalar_lea.vmem [#allocation2], 160
  %328 = vst.msk [vmem:[%s327] ss:$8 sm:$0xf] %vm75, %v325
  %329 = vst.msk [vmem:[%s327] ss:$8 sm:$0x0] %vm75, %v325
  %330 = vrot.lane.b32.xlu0 %v86, 96
  %v331 = vpop.permute.xlu0 %330
  %332 = vrot.lane.b32.xlu0 %v90, 96
  %v333 = vpop.permute.xlu0 %332
  %334 = vrot.lane.b32.xlu0 %v94, 96
  %v335 = vpop.permute.xlu0 %334
  %336 = vrot.lane.b32.xlu0 %v98, 96
  %v337 = vpop.permute.xlu0 %336
  %vm338 = vcmp.lt.s32.totalorder %v112, 96
  %v339 = vsel %vm338, %v335, %v337
  %v340 = vsel %vm338, %v333, %v335
  %v341 = vsel %vm338, %v331, %v333
  %v342 = vsel %vm338, %v337, %v331
  %v347 = vcombine.low %v341, %v340
  %v348 = vcombine.low %v339, %v342
  %v350 = vunpack.c.l.s4 1966171168
  %v351 = vunpack.c.0.s8 %v350
  %v352 = vlaneseq
  %v353 = vshrl.u32 %v352, 7
  %v354 = vsub.s32 %v351, %v353
  %v355 = vrot.slane %v347, %v354
  %v357 = vunpack.c.l.s4 1966171168
  %v358 = vunpack.c.0.s8 %v357
  %v359 = vlaneseq
  %v360 = vshrl.u32 %v359, 7
  %v361 = vsub.s32 %v358, %v360
  %v362 = vrot.slane %v348, %v361
  %v363 = vcombine.low %v355, %v362
  %v365 = vunpack.c.l.s4 1966171168
  %v366 = vunpack.c.0.s8 %v365
  %v367 = vlaneseq
  %v368 = vshrl.u32 %v367, 7
  %v369 = vsub.s32 %v366, %v368
  %v370 = vrot.slane %v363, %v369
  %s372 = scalar_lea.vmem [#allocation2], 192
  %373 = vst.msk [vmem:[%s372] ss:$8 sm:$0xf] %vm75, %v370
  %374 = vst.msk [vmem:[%s372] ss:$8 sm:$0x0] %vm75, %v370
  %375 = vrot.lane.b32.xlu0 %v86, 95
  %v376 = vpop.permute.xlu0 %375
  %377 = vrot.lane.b32.xlu0 %v90, 95
  %v378 = vpop.permute.xlu0 %377
  %379 = vrot.lane.b32.xlu0 %v94, 95
  %v380 = vpop.permute.xlu0 %379
  %381 = vrot.lane.b32.xlu0 %v98, 95
  %v382 = vpop.permute.xlu0 %381
  %vm383 = vcmp.lt.s32.totalorder %v112, 95
  %v384 = vsel %vm383, %v380, %v382
  %v385 = vsel %vm383, %v378, %v380
  %v386 = vsel %vm383, %v376, %v378
  %v387 = vsel %vm383, %v382, %v376
  %v392 = vcombine.low %v386, %v385
  %v393 = vcombine.low %v384, %v387
  %v395 = vunpack.c.l.s4 1966171168
  %v396 = vunpack.c.0.s8 %v395
  %v397 = vlaneseq
  %v398 = vshrl.u32 %v397, 7
  %v399 = vsub.s32 %v396, %v398
  %v400 = vrot.slane %v392, %v399
  %v402 = vunpack.c.l.s4 1966171168
  %v403 = vunpack.c.0.s8 %v402
  %v404 = vlaneseq
  %v405 = vshrl.u32 %v404, 7
  %v406 = vsub.s32 %v403, %v405
  %v407 = vrot.slane %v393, %v406
  %v408 = vcombine.low %v400, %v407
  %v410 = vunpack.c.l.s4 1966171168
  %v411 = vunpack.c.0.s8 %v410
  %v412 = vlaneseq
  %v413 = vshrl.u32 %v412, 7
  %v414 = vsub.s32 %v411, %v413
  %v415 = vrot.slane %v408, %v414
  %s417 = scalar_lea.vmem [#allocation2], 224
  %418 = vst.msk [vmem:[%s417] ss:$8 sm:$0xf] %vm75, %v415
  %419 = vst.msk [vmem:[%s417] ss:$8 sm:$0x0] %vm75, %v415
  %420 = vrot.lane.b32.xlu0 %v86, 94
  %v421 = vpop.permute.xlu0 %420
  %422 = vrot.lane.b32.xlu0 %v90, 94
  %v423 = vpop.permute.xlu0 %422
  %424 = vrot.lane.b32.xlu0 %v94, 94
  %v425 = vpop.permute.xlu0 %424
  %426 = vrot.lane.b32.xlu0 %v98, 94
  %v427 = vpop.permute.xlu0 %426
  %vm428 = vcmp.lt.s32.totalorder %v112, 94
  %v429 = vsel %vm428, %v425, %v427
  %v430 = vsel %vm428, %v423, %v425
  %v431 = vsel %vm428, %v421, %v423
  %v432 = vsel %vm428, %v427, %v421
  %v437 = vcombine.low %v431, %v430
  %v438 = vcombine.low %v429, %v432
  %v440 = vunpack.c.l.s4 1966171168
  %v441 = vunpack.c.0.s8 %v440
  %v442 = vlaneseq
  %v443 = vshrl.u32 %v442, 7
  %v444 = vsub.s32 %v441, %v443
  %v445 = vrot.slane %v437, %v444
  %v447 = vunpack.c.l.s4 1966171168
  %v448 = vunpack.c.0.s8 %v447
  %v449 = vlaneseq
  %v450 = vshrl.u32 %v449, 7
  %v451 = vsub.s32 %v448, %v450
  %v452 = vrot.slane %v438, %v451
  %v453 = vcombine.low %v445, %v452
  %v455 = vunpack.c.l.s4 1966171168
  %v456 = vunpack.c.0.s8 %v455
  %v457 = vlaneseq
  %v458 = vshrl.u32 %v457, 7
  %v459 = vsub.s32 %v456, %v458
  %v460 = vrot.slane %v453, %v459
  %s462 = scalar_lea.vmem [#allocation2], 256
  %463 = vst.msk [vmem:[%s462] ss:$8 sm:$0xf] %vm75, %v460
  %464 = vst.msk [vmem:[%s462] ss:$8 sm:$0x0] %vm75, %v460
  %v465 = vld [vmem:[%s5] sm:$0x3]
  %v466 = vld [vmem:[#allocation2] sm:$0xff]
  %v467 = vld [vmem:[#allocation2 + $0x8] sm:$0xff]
  %v468 = vld [vmem:[#allocation2 + $0x10] sm:$0xff]
  %v469 = vld [vmem:[#allocation2 + $0x18] sm:$0xff]
  %v470 = vld [vmem:[#allocation2 + $0x20] sm:$0xff]
  %v471 = vld [vmem:[#allocation2 + $0x28] sm:$0xff]
  %v472 = vld [vmem:[#allocation2 + $0x30] sm:$0xff]
  %v473 = vld [vmem:[#allocation2 + $0x38] sm:$0xff]
  %v474 = vld [vmem:[#allocation2 + $0x40] sm:$0xff]
  %v475 = vld [vmem:[#allocation2 + $0x48] sm:$0xff]
  %v476 = vld [vmem:[#allocation2 + $0x50] sm:$0xff]
  %v477 = vld [vmem:[#allocation2 + $0x58] sm:$0xff]
  %v478 = vld [vmem:[#allocation2 + $0x60] sm:$0xff]
  %v479 = vld [vmem:[#allocation2 + $0x68] sm:$0xff]
  %v480 = vld [vmem:[#allocation2 + $0x70] sm:$0xff]
  %v481 = vld [vmem:[#allocation2 + $0x78] sm:$0xff]
  %v482 = vld [vmem:[#allocation2 + $0x80] sm:$0xff]
  %v483 = vld [vmem:[#allocation2 + $0x88] sm:$0xff]
  %v484 = vld [vmem:[#allocation2 + $0x90] sm:$0xff]
  %v485 = vld [vmem:[#allocation2 + $0x98] sm:$0xff]
  %v486 = vld [vmem:[#allocation2 + $0xa0] sm:$0xff]
  %v487 = vld [vmem:[#allocation2 + $0xa8] sm:$0xff]
  %v488 = vld [vmem:[#allocation2 + $0xb0] sm:$0xff]
  %v489 = vld [vmem:[#allocation2 + $0xb8] sm:$0xff]
  %v490 = vld [vmem:[#allocation2 + $0xc0] sm:$0xff]
  %v491 = vld [vmem:[#allocation2 + $0xc8] sm:$0xff]
  %v492 = vld [vmem:[#allocation2 + $0xd0] sm:$0xff]
  %v493 = vld [vmem:[#allocation2 + $0xd8] sm:$0xff]
  %v494 = vld [vmem:[#allocation2 + $0xe0] sm:$0xff]
  %v495 = vld [vmem:[#allocation2 + $0xe8] sm:$0xff]
  %v496 = vld [vmem:[#allocation2 + $0xf0] sm:$0xff]
  %v497 = vld [vmem:[#allocation2 + $0xf8] sm:$0xff]
  %v498 = vld [vmem:[#allocation2 + $0x100] sm:$0xff]
  %v499 = vld [vmem:[#allocation2 + $0x108] sm:$0xff]
  %v500 = vld [vmem:[#allocation2 + $0x110] sm:$0xff]
  %v501 = vld [vmem:[#allocation2 + $0x118] sm:$0xff]
  %v502 = vld [vmem:[#allocation2 + $0x120] sm:$0xff]
  %v503 = vld [vmem:[#allocation2 + $0x128] sm:$0xff]
  %v504 = vld [vmem:[#allocation2 + $0x130] sm:$0xff]
  %v505 = vld [vmem:[#allocation2 + $0x138] sm:$0xff]
  %vm506 = vcmask 654336
  %v508 = vsel %vm506, %v465, 0
  %510 = vmatprep.subr.mxu0 0.0
  %511 = vmatpush1.msra.mxu0 0.0
  %512 = vmatprep.subr.mxu0 0.0
  %513 = vmatpush1.msra.mxu0 0.0
  %514 = vmatprep.subr.mxu0 0.0
  %515 = vmatpush1.msra.mxu0 0.0
  %516 = vmatprep.subr.mxu0 0.0
  %517 = vmatpush1.msra.mxu0 0.0
  %518 = vmatprep.subr.mxu0 0.0
  %519 = vmatpush1.msra.mxu0 0.0
  %520 = vmatprep.subr.mxu0 0.0
  %521 = vmatpush1.msra.mxu0 0.0
  %522 = vmatprep.subr.mxu0 %v503
  %523 = vmatpush1.msra.mxu0 %v502
  %524 = vmatprep.subr.mxu0 %v499
  %525 = vmatpush1.msra.mxu0 %v498
  %526 = vmatprep.subr.mxu0 %v495
  %527 = vmatpush1.msra.mxu0 %v494
  %528 = vmatprep.subr.mxu0 %v491
  %529 = vmatpush1.msra.mxu0 %v490
  %530 = vmatprep.subr.mxu0 %v487
  %531 = vmatpush1.msra.mxu0 %v486
  %532 = vmatprep.subr.mxu0 %v483
  %533 = vmatpush1.msra.mxu0 %v482
  %534 = vmatprep.subr.mxu0 %v479
  %535 = vmatpush1.msra.mxu0 %v478
  %536 = vmatprep.subr.mxu0 %v475
  %537 = vmatpush1.msra.mxu0 %v474
  %538 = vmatprep.subr.mxu0 %v471
  %539 = vmatpush1.msra.mxu0 %v470
  %540 = vmatprep.subr.mxu0 %v467
  %541 = vmatpush1.msra.mxu0 %v466
  %542 = vmatprep.subr.mxu0 0.0
  %543 = vmatpush2.msra.mxu0 0.0
  %544 = vmatprep.subr.mxu0 0.0
  %545 = vmatpush2.msra.mxu0 0.0
  %546 = vmatprep.subr.mxu0 0.0
  %547 = vmatpush2.msra.mxu0 0.0
  %548 = vmatprep.subr.mxu0 0.0
  %549 = vmatpush2.msra.mxu0 0.0
  %550 = vmatprep.subr.mxu0 0.0
  %551 = vmatpush2.msra.mxu0 0.0
  %552 = vmatprep.subr.mxu0 0.0
  %553 = vmatpush2.msra.mxu0 0.0
  %554 = vmatprep.subr.mxu0 0.0
  %555 = vmatpush2.msra.mxu0 0.0
  %556 = vmatprep.subr.mxu0 0.0
  %557 = vmatpush2.msra.mxu0 0.0
  %558 = vmatprep.subr.mxu0 0.0
  %559 = vmatpush2.msra.mxu0 0.0
  %560 = vmatprep.subr.mxu0 0.0
  %561 = vmatpush2.msra.mxu0 0.0
  %562 = vmatprep.subr.mxu0 0.0
  %563 = vmatpush2.msra.mxu0 0.0
  %564 = vmatprep.subr.mxu0 0.0
  %565 = vmatpush2.msra.mxu0 0.0
  %566 = vmatprep.subr.mxu0 0.0
  %567 = vmatpush2.msra.mxu0 0.0
  %568 = vmatprep.subr.mxu0 0.0
  %569 = vmatpush2.msra.mxu0 0.0
  %570 = vmatprep.subr.mxu0 0.0
  %571 = vmatpush2.msra.mxu0 0.0
  %572 = vmatprep.subr.mxu0 0.0
  %573 = vmatpush2.msra.mxu0 0.0
  %574 = vmatprep.mubr.f32.mxu0 0.0
  %575 = vmatmul.mubr.f32.gmra.mxu0 %v508
  %v576 = vpop.f32.mrf.mxu0
  %v577 = vadd.f32 0.0, %v576
  %v578 = vpop.f32.mrf.mxu0
  %v579 = vadd.f32 0.0, %v578
  %580 = vdwg.mxu0
  %581 = vmatprep.subr.mxu0 0.0
  %582 = vmatpush1.msra.mxu0 0.0
  %583 = vmatprep.subr.mxu0 0.0
  %584 = vmatpush1.msra.mxu0 0.0
  %585 = vmatprep.subr.mxu0 0.0
  %586 = vmatpush1.msra.mxu0 0.0
  %587 = vmatprep.subr.mxu0 0.0
  %588 = vmatpush1.msra.mxu0 0.0
  %589 = vmatprep.subr.mxu0 0.0
  %590 = vmatpush1.msra.mxu0 0.0
  %591 = vmatprep.subr.mxu0 0.0
  %592 = vmatpush1.msra.mxu0 0.0
  %593 = vmatprep.subr.mxu0 %v505
  %594 = vmatpush1.msra.mxu0 %v504
  %595 = vmatprep.subr.mxu0 %v501
  %596 = vmatpush1.msra.mxu0 %v500
  %597 = vmatprep.subr.mxu0 %v497
  %598 = vmatpush1.msra.mxu0 %v496
  %599 = vmatprep.subr.mxu0 %v493
  %600 = vmatpush1.msra.mxu0 %v492
  %601 = vmatprep.subr.mxu0 %v489
  %602 = vmatpush1.msra.mxu0 %v488
  %603 = vmatprep.subr.mxu0 %v485
  %604 = vmatpush1.msra.mxu0 %v484
  %605 = vmatprep.subr.mxu0 %v481
  %606 = vmatpush1.msra.mxu0 %v480
  %607 = vmatprep.subr.mxu0 %v477
  %608 = vmatpush1.msra.mxu0 %v476
  %609 = vmatprep.subr.mxu0 %v473
  %610 = vmatpush1.msra.mxu0 %v472
  %611 = vmatprep.subr.mxu0 %v469
  %612 = vmatpush1.msra.mxu0 %v468
  %613 = vmatprep.subr.mxu0 0.0
  %614 = vmatpush2.msra.mxu0 0.0
  %615 = vmatprep.subr.mxu0 0.0
  %616 = vmatpush2.msra.mxu0 0.0
  %617 = vmatprep.subr.mxu0 0.0
  %618 = vmatpush2.msra.mxu0 0.0
  %619 = vmatprep.subr.mxu0 0.0
  %620 = vmatpush2.msra.mxu0 0.0
  %621 = vmatprep.subr.mxu0 0.0
  %622 = vmatpush2.msra.mxu0 0.0
  %623 = vmatprep.subr.mxu0 0.0
  %624 = vmatpush2.msra.mxu0 0.0
  %625 = vmatprep.subr.mxu0 0.0
  %626 = vmatpush2.msra.mxu0 0.0
  %627 = vmatprep.subr.mxu0 0.0
  %628 = vmatpush2.msra.mxu0 0.0
  %629 = vmatprep.subr.mxu0 0.0
  %630 = vmatpush2.msra.mxu0 0.0
  %631 = vmatprep.subr.mxu0 0.0
  %632 = vmatpush2.msra.mxu0 0.0
  %633 = vmatprep.subr.mxu0 0.0
  %634 = vmatpush2.msra.mxu0 0.0
  %635 = vmatprep.subr.mxu0 0.0
  %636 = vmatpush2.msra.mxu0 0.0
  %637 = vmatprep.subr.mxu0 0.0
  %638 = vmatpush2.msra.mxu0 0.0
  %639 = vmatprep.subr.mxu0 0.0
  %640 = vmatpush2.msra.mxu0 0.0
  %641 = vmatprep.subr.mxu0 0.0
  %642 = vmatpush2.msra.mxu0 0.0
  %643 = vmatprep.subr.mxu0 0.0
  %644 = vmatpush2.msra.mxu0 0.0
  %645 = vmatprep.mubr.f32.mxu0 0.0
  %646 = vmatmul.mubr.f32.gmra.mxu0 %v508
  %v647 = vpop.f32.mrf.mxu0
  %v648 = vadd.f32 0.0, %v647
  %v649 = vpop.f32.mrf.mxu0
  %v650 = vadd.f32 0.0, %v649
  %651 = vdwg.mxu0
  %v652 = vld [vmem:[%s1] sm:$0xff]
  %v653 = vld [vmem:[%s2] sm:$0xff]
  %v654 = vld [vmem:[%s8] sm:$0x3]
  %656 = vset.pattern.permute.xlu0 0
  %657 = vperm.xlu0 %656, %v654
  %v658 = vpop.permute.xlu0 %657
  %v661 = vcombine.high %v652, %v652
  %v663 = vunpack.c.l.s4 1983009808
  %v664 = vunpack.c.0.s8 %v663
  %v665 = vlaneseq
  %v666 = vshrl.u32 %v665, 7
  %v667 = vsub.s32 %v664, %v666
  %v668 = vrot.slane %v652, %v667
  %v670 = vunpack.c.l.s4 1983009808
  %v671 = vunpack.c.0.s8 %v670
  %v672 = vlaneseq
  %v673 = vshrl.u32 %v672, 7
  %v674 = vsub.s32 %v671, %v673
  %v675 = vrot.slane %v661, %v674
  %v676 = vcombine.high %v668, %v668
  %v677 = vcombine.high %v675, %v675
  %v682 = vmul.f32 %v658, %v668
  %v683 = vmul.f32 %v658, %v676
  %v684 = vmul.f32 %v658, %v675
  %v685 = vmul.f32 %v658, %v677
  %v686 = vadd.f32 %v682, %v577
  %v687 = vadd.f32 %v683, %v579
  %v688 = vadd.f32 %v684, %v648
  %v689 = vadd.f32 %v685, %v650
  %v690 = vld [vmem:[%s8 + $0x4] sm:$0x3]
  %692 = vset.pattern.permute.xlu0 0
  %693 = vperm.xlu0 %692, %v690
  %v694 = vpop.permute.xlu0 %693
  %v697 = vcombine.high %v653, %v653
  %v699 = vunpack.c.l.s4 1983009808
  %v700 = vunpack.c.0.s8 %v699
  %v701 = vlaneseq
  %v702 = vshrl.u32 %v701, 7
  %v703 = vsub.s32 %v700, %v702
  %v704 = vrot.slane %v653, %v703
  %v706 = vunpack.c.l.s4 1983009808
  %v707 = vunpack.c.0.s8 %v706
  %v708 = vlaneseq
  %v709 = vshrl.u32 %v708, 7
  %v710 = vsub.s32 %v707, %v709
  %v711 = vrot.slane %v697, %v710
  %v712 = vcombine.high %v704, %v704
  %v713 = vcombine.high %v711, %v711
  %v718 = vmul.f32 %v694, %v704
  %v719 = vmul.f32 %v694, %v712
  %v720 = vmul.f32 %v694, %v711
  %v721 = vmul.f32 %v694, %v713
  %v722 = vld [vmem:[%s8 + $0x2] sm:$0x3]
  %724 = vset.pattern.permute.xlu0 0
  %725 = vperm.xlu0 %724, %v722
  %v726 = vpop.permute.xlu0 %725
  %v728 = vmul.f32 %v726, %v668
  %v729 = vmul.f32 %v726, %v676
  %v730 = vmul.f32 %v726, %v675
  %v731 = vmul.f32 %v726, %v677
  %v732 = vadd.f32 %v718, %v728
  %v733 = vadd.f32 %v719, %v729
  %v734 = vadd.f32 %v720, %v730
  %v735 = vadd.f32 %v721, %v731
  %v736 = vld [vmem:[%s8 + $0x6] sm:$0x3]
  %738 = vset.pattern.permute.xlu0 0
  %739 = vperm.xlu0 %738, %v736
  %v740 = vpop.permute.xlu0 %739
  %v742 = vmul.f32 %v686, %v740
  %v743 = vmul.f32 %v687, %v740
  %v744 = vmul.f32 %v688, %v740
  %v745 = vmul.f32 %v689, %v740
  %v746 = vld [vmem:[%s8 + $0x8] sm:$0x3]
  %748 = vset.pattern.permute.xlu0 0
  %749 = vperm.xlu0 %748, %v746
  %v750 = vpop.permute.xlu0 %749
  %v752 = vmul.f32 %v732, %v750
  %v753 = vmul.f32 %v733, %v750
  %v754 = vmul.f32 %v734, %v750
  %v755 = vmul.f32 %v735, %v750
  %v756 = vadd.f32 %v742, %v752
  %v757 = vadd.f32 %v743, %v753
  %v758 = vadd.f32 %v744, %v754
  %v759 = vadd.f32 %v745, %v755
  %v760 = vld [vmem:[%s8 + $0xa] sm:$0x3]
  %762 = vset.pattern.permute.xlu0 0
  %763 = vperm.xlu0 %762, %v760
  %v764 = vpop.permute.xlu0 %763
  %v766 = vadd.f32 %v756, %v764
  %v767 = vadd.f32 %v757, %v764
  %v768 = vadd.f32 %v758, %v764
  %v769 = vadd.f32 %v759, %v764
  %v770 = vmax.f32 %v766, 0.0
  %v771 = vmax.f32 %v767, 0.0
  %v772 = vmax.f32 %v768, 0.0
  %v773 = vmax.f32 %v769, 0.0
  %v774 = vmin.f32 %v770, 1.0
  %v775 = vmin.f32 %v771, 1.0
  %v776 = vmin.f32 %v772, 1.0
  %v777 = vmin.f32 %v773, 1.0
  %778 = vst [vmem:[#allocation2] sm:$0x3] %v774
  %779 = vst [vmem:[#allocation2 + $0x8] sm:$0x3] %v775
  %780 = vst [vmem:[#allocation2 + $0x10] sm:$0x3] %v776
  %781 = vst [vmem:[#allocation2 + $0x18] sm:$0x3] %v777
  %782 = vrot.lane.b32.xlu0 %v774, 127
  %v783 = vpop.permute.xlu0 %782
  %784 = vrot.lane.b32.xlu0 %v775, 127
  %v785 = vpop.permute.xlu0 %784
  %786 = vrot.lane.b32.xlu0 %v776, 127
  %v787 = vpop.permute.xlu0 %786
  %788 = vrot.lane.b32.xlu0 %v777, 127
  %v789 = vpop.permute.xlu0 %788
  %v790 = vsel %vm113, %v787, %v789
  %v791 = vsel %vm113, %v785, %v787
  %v792 = vsel %vm113, %v783, %v785
  %v793 = vsel %vm113, %v789, %v783
  %794 = vst [vmem:[#allocation2 + $0x20] sm:$0x3] %v792
  %795 = vst [vmem:[#allocation2 + $0x28] sm:$0x3] %v791
  %796 = vst [vmem:[#allocation2 + $0x30] sm:$0x3] %v790
  %797 = vst [vmem:[#allocation2 + $0x38] sm:$0x3] %v793
  %798 = vrot.lane.b32.xlu0 %v774, 126
  %v799 = vpop.permute.xlu0 %798
  %800 = vrot.lane.b32.xlu0 %v775, 126
  %v801 = vpop.permute.xlu0 %800
  %802 = vrot.lane.b32.xlu0 %v776, 126
  %v803 = vpop.permute.xlu0 %802
  %804 = vrot.lane.b32.xlu0 %v777, 126
  %v805 = vpop.permute.xlu0 %804
  %v806 = vsel %vm158, %v803, %v805
  %v807 = vsel %vm158, %v801, %v803
  %v808 = vsel %vm158, %v799, %v801
  %v809 = vsel %vm158, %v805, %v799
  %810 = vst [vmem:[#allocation2 + $0x40] sm:$0x3] %v808
  %811 = vst [vmem:[#allocation2 + $0x48] sm:$0x3] %v807
  %812 = vst [vmem:[#allocation2 + $0x50] sm:$0x3] %v806
  %813 = vst [vmem:[#allocation2 + $0x58] sm:$0x3] %v809
  %814 = vrot.lane.b32.xlu0 %v774, 112
  %v815 = vpop.permute.xlu0 %814
  %816 = vrot.lane.b32.xlu0 %v775, 112
  %v817 = vpop.permute.xlu0 %816
  %818 = vrot.lane.b32.xlu0 %v776, 112
  %v819 = vpop.permute.xlu0 %818
  %820 = vrot.lane.b32.xlu0 %v777, 112
  %v821 = vpop.permute.xlu0 %820
  %v822 = vsel %vm203, %v819, %v821
  %v823 = vsel %vm203, %v817, %v819
  %v824 = vsel %vm203, %v815, %v817
  %v825 = vsel %vm203, %v821, %v815
  %826 = vst [vmem:[#allocation2 + $0x60] sm:$0x3] %v824
  %827 = vst [vmem:[#allocation2 + $0x68] sm:$0x3] %v823
  %828 = vst [vmem:[#allocation2 + $0x70] sm:$0x3] %v822
  %829 = vst [vmem:[#allocation2 + $0x78] sm:$0x3] %v825
  %830 = vrot.lane.b32.xlu0 %v774, 111
  %v831 = vpop.permute.xlu0 %830
  %832 = vrot.lane.b32.xlu0 %v775, 111
  %v833 = vpop.permute.xlu0 %832
  %834 = vrot.lane.b32.xlu0 %v776, 111
  %v835 = vpop.permute.xlu0 %834
  %836 = vrot.lane.b32.xlu0 %v777, 111
  %v837 = vpop.permute.xlu0 %836
  %v838 = vsel %vm248, %v835, %v837
  %v839 = vsel %vm248, %v833, %v835
  %v840 = vsel %vm248, %v831, %v833
  %v841 = vsel %vm248, %v837, %v831
  %842 = vst [vmem:[#allocation2 + $0x80] sm:$0x3] %v840
  %843 = vst [vmem:[#allocation2 + $0x88] sm:$0x3] %v839
  %844 = vst [vmem:[#allocation2 + $0x90] sm:$0x3] %v838
  %845 = vst [vmem:[#allocation2 + $0x98] sm:$0x3] %v841
  %846 = vrot.lane.b32.xlu0 %v774, 110
  %v847 = vpop.permute.xlu0 %846
  %848 = vrot.lane.b32.xlu0 %v775, 110
  %v849 = vpop.permute.xlu0 %848
  %850 = vrot.lane.b32.xlu0 %v776, 110
  %v851 = vpop.permute.xlu0 %850
  %852 = vrot.lane.b32.xlu0 %v777, 110
  %v853 = vpop.permute.xlu0 %852
  %v854 = vsel %vm293, %v851, %v853
  %v855 = vsel %vm293, %v849, %v851
  %v856 = vsel %vm293, %v847, %v849
  %v857 = vsel %vm293, %v853, %v847
  %858 = vst [vmem:[#allocation2 + $0xa0] sm:$0x3] %v856
  %859 = vst [vmem:[#allocation2 + $0xa8] sm:$0x3] %v855
  %860 = vst [vmem:[#allocation2 + $0xb0] sm:$0x3] %v854
  %861 = vst [vmem:[#allocation2 + $0xb8] sm:$0x3] %v857
  %862 = vrot.lane.b32.xlu0 %v774, 96
  %v863 = vpop.permute.xlu0 %862
  %864 = vrot.lane.b32.xlu0 %v775, 96
  %v865 = vpop.permute.xlu0 %864
  %866 = vrot.lane.b32.xlu0 %v776, 96
  %v867 = vpop.permute.xlu0 %866
  %868 = vrot.lane.b32.xlu0 %v777, 96
  %v869 = vpop.permute.xlu0 %868
  %v870 = vsel %vm338, %v867, %v869
  %v871 = vsel %vm338, %v865, %v867
  %v872 = vsel %vm338, %v863, %v865
  %v873 = vsel %vm338, %v869, %v863
  %874 = vst [vmem:[#allocation2 + $0xc0] sm:$0x3] %v872
  %875 = vst [vmem:[#allocation2 + $0xc8] sm:$0x3] %v871
  %876 = vst [vmem:[#allocation2 + $0xd0] sm:$0x3] %v870
  %877 = vst [vmem:[#allocation2 + $0xd8] sm:$0x3] %v873
  %878 = vrot.lane.b32.xlu0 %v774, 95
  %v879 = vpop.permute.xlu0 %878
  %880 = vrot.lane.b32.xlu0 %v775, 95
  %v881 = vpop.permute.xlu0 %880
  %882 = vrot.lane.b32.xlu0 %v776, 95
  %v883 = vpop.permute.xlu0 %882
  %884 = vrot.lane.b32.xlu0 %v777, 95
  %v885 = vpop.permute.xlu0 %884
  %v886 = vsel %vm383, %v883, %v885
  %v887 = vsel %vm383, %v881, %v883
  %v888 = vsel %vm383, %v879, %v881
  %v889 = vsel %vm383, %v885, %v879
  %890 = vst [vmem:[#allocation2 + $0xe0] sm:$0x3] %v888
  %891 = vst [vmem:[#allocation2 + $0xe8] sm:$0x3] %v887
  %892 = vst [vmem:[#allocation2 + $0xf0] sm:$0x3] %v886
  %893 = vst [vmem:[#allocation2 + $0xf8] sm:$0x3] %v889
  %894 = vrot.lane.b32.xlu0 %v774, 94
  %v895 = vpop.permute.xlu0 %894
  %896 = vrot.lane.b32.xlu0 %v775, 94
  %v897 = vpop.permute.xlu0 %896
  %898 = vrot.lane.b32.xlu0 %v776, 94
  %v899 = vpop.permute.xlu0 %898
  %900 = vrot.lane.b32.xlu0 %v777, 94
  %v901 = vpop.permute.xlu0 %900
  %v902 = vsel %vm428, %v899, %v901
  %v903 = vsel %vm428, %v897, %v899
  %v904 = vsel %vm428, %v895, %v897
  %v905 = vsel %vm428, %v901, %v895
  %906 = vst [vmem:[#allocation2 + $0x100] sm:$0x3] %v904
  %907 = vst [vmem:[#allocation2 + $0x108] sm:$0x3] %v903
  %908 = vst [vmem:[#allocation2 + $0x110] sm:$0x3] %v902
  %909 = vst [vmem:[#allocation2 + $0x118] sm:$0x3] %v905
  %v910 = vld [vmem:[%s6] sm:$0xf]
  %v911 = vld [vmem:[#allocation2] sm:$0xff]
  %v912 = vld [vmem:[#allocation2 + $0x8] sm:$0xff]
  %v913 = vld [vmem:[#allocation2 + $0x10] sm:$0xff]
  %v914 = vld [vmem:[#allocation2 + $0x18] sm:$0xff]
  %v915 = vld [vmem:[#allocation2 + $0x20] sm:$0xff]
  %v916 = vld [vmem:[#allocation2 + $0x28] sm:$0xff]
  %v917 = vld [vmem:[#allocation2 + $0x30] sm:$0xff]
  %v918 = vld [vmem:[#allocation2 + $0x38] sm:$0xff]
  %v919 = vld [vmem:[#allocation2 + $0x40] sm:$0xff]
  %v920 = vld [vmem:[#allocation2 + $0x48] sm:$0xff]
  %v921 = vld [vmem:[#allocation2 + $0x50] sm:$0xff]
  %v922 = vld [vmem:[#allocation2 + $0x58] sm:$0xff]
  %v923 = vld [vmem:[#allocation2 + $0x60] sm:$0xff]
  %v924 = vld [vmem:[#allocation2 + $0x68] sm:$0xff]
  %v925 = vld [vmem:[#allocation2 + $0x70] sm:$0xff]
  %v926 = vld [vmem:[#allocation2 + $0x78] sm:$0xff]
  %v927 = vld [vmem:[#allocation2 + $0x80] sm:$0xff]
  %v928 = vld [vmem:[#allocation2 + $0x88] sm:$0xff]
  %v929 = vld [vmem:[#allocation2 + $0x90] sm:$0xff]
  %v930 = vld [vmem:[#allocation2 + $0x98] sm:$0xff]
  %v931 = vld [vmem:[#allocation2 + $0xa0] sm:$0xff]
  %v932 = vld [vmem:[#allocation2 + $0xa8] sm:$0xff]
  %v933 = vld [vmem:[#allocation2 + $0xb0] sm:$0xff]
  %v934 = vld [vmem:[#allocation2 + $0xb8] sm:$0xff]
  %v935 = vld [vmem:[#allocation2 + $0xc0] sm:$0xff]
  %v936 = vld [vmem:[#allocation2 + $0xc8] sm:$0xff]
  %v937 = vld [vmem:[#allocation2 + $0xd0] sm:$0xff]
  %v938 = vld [vmem:[#allocation2 + $0xd8] sm:$0xff]
  %v939 = vld [vmem:[#allocation2 + $0xe0] sm:$0xff]
  %v940 = vld [vmem:[#allocation2 + $0xe8] sm:$0xff]
  %v941 = vld [vmem:[#allocation2 + $0xf0] sm:$0xff]
  %v942 = vld [vmem:[#allocation2 + $0xf8] sm:$0xff]
  %v943 = vld [vmem:[#allocation2 + $0x100] sm:$0xff]
  %v944 = vld [vmem:[#allocation2 + $0x108] sm:$0xff]
  %v945 = vld [vmem:[#allocation2 + $0x110] sm:$0xff]
  %v946 = vld [vmem:[#allocation2 + $0x118] sm:$0xff]
  %v947 = vld [vmem:[#allocation2 + $0x120] sm:$0xff]
  %v948 = vld [vmem:[#allocation2 + $0x128] sm:$0xff]
  %v949 = vld [vmem:[#allocation2 + $0x130] sm:$0xff]
  %v950 = vld [vmem:[#allocation2 + $0x138] sm:$0xff]
  %v952 = vsel %vm506, %v910, 0
  %954 = vmatprep.subr.mxu0 0.0
  %955 = vmatpush1.msra.mxu0 0.0
  %956 = vmatprep.subr.mxu0 0.0
  %957 = vmatpush1.msra.mxu0 0.0
  %958 = vmatprep.subr.mxu0 0.0
  %959 = vmatpush1.msra.mxu0 0.0
  %960 = vmatprep.subr.mxu0 0.0
  %961 = vmatpush1.msra.mxu0 0.0
  %962 = vmatprep.subr.mxu0 0.0
  %963 = vmatpush1.msra.mxu0 0.0
  %964 = vmatprep.subr.mxu0 0.0
  %965 = vmatpush1.msra.mxu0 0.0
  %966 = vmatprep.subr.mxu0 %v948
  %967 = vmatpush1.msra.mxu0 %v947
  %968 = vmatprep.subr.mxu0 %v944
  %969 = vmatpush1.msra.mxu0 %v943
  %970 = vmatprep.subr.mxu0 %v940
  %971 = vmatpush1.msra.mxu0 %v939
  %972 = vmatprep.subr.mxu0 %v936
  %973 = vmatpush1.msra.mxu0 %v935
  %974 = vmatprep.subr.mxu0 %v932
  %975 = vmatpush1.msra.mxu0 %v931
  %976 = vmatprep.subr.mxu0 %v928
  %977 = vmatpush1.msra.mxu0 %v927
  %978 = vmatprep.subr.mxu0 %v924
  %979 = vmatpush1.msra.mxu0 %v923
  %980 = vmatprep.subr.mxu0 %v920
  %981 = vmatpush1.msra.mxu0 %v919
  %982 = vmatprep.subr.mxu0 %v916
  %983 = vmatpush1.msra.mxu0 %v915
  %984 = vmatprep.subr.mxu0 %v912
  %985 = vmatpush1.msra.mxu0 %v911
  %986 = vmatprep.subr.mxu0 0.0
  %987 = vmatpush2.msra.mxu0 0.0
  %988 = vmatprep.subr.mxu0 0.0
  %989 = vmatpush2.msra.mxu0 0.0
  %990 = vmatprep.subr.mxu0 0.0
  %991 = vmatpush2.msra.mxu0 0.0
  %992 = vmatprep.subr.mxu0 0.0
  %993 = vmatpush2.msra.mxu0 0.0
  %994 = vmatprep.subr.mxu0 0.0
  %995 = vmatpush2.msra.mxu0 0.0
  %996 = vmatprep.subr.mxu0 0.0
  %997 = vmatpush2.msra.mxu0 0.0
  %998 = vmatprep.subr.mxu0 0.0
  %999 = vmatpush2.msra.mxu0 0.0
  %1000 = vmatprep.subr.mxu0 0.0
  %1001 = vmatpush2.msra.mxu0 0.0
  %1002 = vmatprep.subr.mxu0 0.0
  %1003 = vmatpush2.msra.mxu0 0.0
  %1004 = vmatprep.subr.mxu0 0.0
  %1005 = vmatpush2.msra.mxu0 0.0
  %1006 = vmatprep.subr.mxu0 0.0
  %1007 = vmatpush2.msra.mxu0 0.0
  %1008 = vmatprep.subr.mxu0 0.0
  %1009 = vmatpush2.msra.mxu0 0.0
  %1010 = vmatprep.subr.mxu0 0.0
  %1011 = vmatpush2.msra.mxu0 0.0
  %1012 = vmatprep.subr.mxu0 0.0
  %1013 = vmatpush2.msra.mxu0 0.0
  %1014 = vmatprep.subr.mxu0 0.0
  %1015 = vmatpush2.msra.mxu0 0.0
  %1016 = vmatprep.subr.mxu0 0.0
  %1017 = vmatpush2.msra.mxu0 0.0
  %1018 = vmatprep.mubr.f32.mxu0 0.0
  %1019 = vmatmul.mubr.f32.gmra.mxu0 %v952
  %v1020 = vpop.f32.mrf.mxu0
  %v1021 = vadd.f32 0.0, %v1020
  %v1022 = vpop.f32.mrf.mxu0
  %v1023 = vadd.f32 0.0, %v1022
  %1024 = vdwg.mxu0
  %1025 = vmatprep.subr.mxu0 0.0
  %1026 = vmatpush1.msra.mxu0 0.0
  %1027 = vmatprep.subr.mxu0 0.0
  %1028 = vmatpush1.msra.mxu0 0.0
  %1029 = vmatprep.subr.mxu0 0.0
  %1030 = vmatpush1.msra.mxu0 0.0
  %1031 = vmatprep.subr.mxu0 0.0
  %1032 = vmatpush1.msra.mxu0 0.0
  %1033 = vmatprep.subr.mxu0 0.0
  %1034 = vmatpush1.msra.mxu0 0.0
  %1035 = vmatprep.subr.mxu0 0.0
  %1036 = vmatpush1.msra.mxu0 0.0
  %1037 = vmatprep.subr.mxu0 %v950
  %1038 = vmatpush1.msra.mxu0 %v949
  %1039 = vmatprep.subr.mxu0 %v946
  %1040 = vmatpush1.msra.mxu0 %v945
  %1041 = vmatprep.subr.mxu0 %v942
  %1042 = vmatpush1.msra.mxu0 %v941
  %1043 = vmatprep.subr.mxu0 %v938
  %1044 = vmatpush1.msra.mxu0 %v937
  %1045 = vmatprep.subr.mxu0 %v934
  %1046 = vmatpush1.msra.mxu0 %v933
  %1047 = vmatprep.subr.mxu0 %v930
  %1048 = vmatpush1.msra.mxu0 %v929
  %1049 = vmatprep.subr.mxu0 %v926
  %1050 = vmatpush1.msra.mxu0 %v925
  %1051 = vmatprep.subr.mxu0 %v922
  %1052 = vmatpush1.msra.mxu0 %v921
  %1053 = vmatprep.subr.mxu0 %v918
  %1054 = vmatpush1.msra.mxu0 %v917
  %1055 = vmatprep.subr.mxu0 %v914
  %1056 = vmatpush1.msra.mxu0 %v913
  %1057 = vmatprep.subr.mxu0 0.0
  %1058 = vmatpush2.msra.mxu0 0.0
  %1059 = vmatprep.subr.mxu0 0.0
  %1060 = vmatpush2.msra.mxu0 0.0
  %1061 = vmatprep.subr.mxu0 0.0
  %1062 = vmatpush2.msra.mxu0 0.0
  %1063 = vmatprep.subr.mxu0 0.0
  %1064 = vmatpush2.msra.mxu0 0.0
  %1065 = vmatprep.subr.mxu0 0.0
  %1066 = vmatpush2.msra.mxu0 0.0
  %1067 = vmatprep.subr.mxu0 0.0
  %1068 = vmatpush2.msra.mxu0 0.0
  %1069 = vmatprep.subr.mxu0 0.0
  %1070 = vmatpush2.msra.mxu0 0.0
  %1071 = vmatprep.subr.mxu0 0.0
  %1072 = vmatpush2.msra.mxu0 0.0
  %1073 = vmatprep.subr.mxu0 0.0
  %1074 = vmatpush2.msra.mxu0 0.0
  %1075 = vmatprep.subr.mxu0 0.0
  %1076 = vmatpush2.msra.mxu0 0.0
  %1077 = vmatprep.subr.mxu0 0.0
  %1078 = vmatpush2.msra.mxu0 0.0
  %1079 = vmatprep.subr.mxu0 0.0
  %1080 = vmatpush2.msra.mxu0 0.0
  %1081 = vmatprep.subr.mxu0 0.0
  %1082 = vmatpush2.msra.mxu0 0.0
  %1083 = vmatprep.subr.mxu0 0.0
  %1084 = vmatpush2.msra.mxu0 0.0
  %1085 = vmatprep.subr.mxu0 0.0
  %1086 = vmatpush2.msra.mxu0 0.0
  %1087 = vmatprep.subr.mxu0 0.0
  %1088 = vmatpush2.msra.mxu0 0.0
  %1089 = vmatprep.mubr.f32.mxu0 0.0
  %1090 = vmatmul.mubr.f32.gmra.mxu0 %v952
  %v1091 = vpop.f32.mrf.mxu0
  %v1092 = vadd.f32 0.0, %v1091
  %v1093 = vpop.f32.mrf.mxu0
  %v1094 = vadd.f32 0.0, %v1093
  %1095 = vdwg.mxu0
  %v1096 = vld [vmem:[%s8 + $0xc] sm:$0xf]
  %v1097 = vld [vmem:[%s3] sm:$0xff]
  %v1098 = vld [vmem:[%s3 + $0x8] sm:$0xff]
  %1100 = vset.pattern.permute.xlu0 0
  %1101 = vperm.xlu0 %1100, %v1096
  %v1102 = vpop.permute.xlu0 %1101
  %v1106 = vcombine.high %v1097, %v1097
  %v1107 = vcombine.high %v1098, %v1098
  %v1110 = vmul.f32 %v1102, %v1097
  %v1111 = vmul.f32 %v1102, %v1106
  %v1112 = vmul.f32 %v1102, %v1098
  %v1113 = vmul.f32 %v1102, %v1107
  %v1114 = vadd.f32 %v1110, %v1021
  %v1115 = vadd.f32 %v1111, %v1023
  %v1116 = vadd.f32 %v1112, %v1092
  %v1117 = vadd.f32 %v1113, %v1094
  %v1118 = vmax.f32 %v1114, 0.0
  %v1119 = vmax.f32 %v1115, 0.0
  %v1120 = vmax.f32 %v1116, 0.0
  %v1121 = vmax.f32 %v1117, 0.0
  %v1122 = vmin.f32 %v1118, 1.0
  %v1123 = vmin.f32 %v1119, 1.0
  %v1124 = vmin.f32 %v1120, 1.0
  %v1125 = vmin.f32 %v1121, 1.0
  %1126 = vst [vmem:[#allocation2] sm:$0xf] %v1122
  %1127 = vst [vmem:[#allocation2 + $0x8] sm:$0xf] %v1123
  %1128 = vst [vmem:[#allocation2 + $0x10] sm:$0xf] %v1124
  %1129 = vst [vmem:[#allocation2 + $0x18] sm:$0xf] %v1125
  %1130 = vrot.lane.b32.xlu0 %v1122, 127
  %v1131 = vpop.permute.xlu0 %1130
  %1132 = vrot.lane.b32.xlu0 %v1123, 127
  %v1133 = vpop.permute.xlu0 %1132
  %1134 = vrot.lane.b32.xlu0 %v1124, 127
  %v1135 = vpop.permute.xlu0 %1134
  %1136 = vrot.lane.b32.xlu0 %v1125, 127
  %v1137 = vpop.permute.xlu0 %1136
  %v1138 = vsel %vm113, %v1135, %v1137
  %v1139 = vsel %vm113, %v1133, %v1135
  %v1140 = vsel %vm113, %v1131, %v1133
  %v1141 = vsel %vm113, %v1137, %v1131
  %1142 = vst [vmem:[#allocation2 + $0x20] sm:$0xf] %v1140
  %1143 = vst [vmem:[#allocation2 + $0x28] sm:$0xf] %v1139
  %1144 = vst [vmem:[#allocation2 + $0x30] sm:$0xf] %v1138
  %1145 = vst [vmem:[#allocation2 + $0x38] sm:$0xf] %v1141
  %1146 = vrot.lane.b32.xlu0 %v1122, 126
  %v1147 = vpop.permute.xlu0 %1146
  %1148 = vrot.lane.b32.xlu0 %v1123, 126
  %v1149 = vpop.permute.xlu0 %1148
  %1150 = vrot.lane.b32.xlu0 %v1124, 126
  %v1151 = vpop.permute.xlu0 %1150
  %1152 = vrot.lane.b32.xlu0 %v1125, 126
  %v1153 = vpop.permute.xlu0 %1152
  %v1154 = vsel %vm158, %v1151, %v1153
  %v1155 = vsel %vm158, %v1149, %v1151
  %v1156 = vsel %vm158, %v1147, %v1149
  %v1157 = vsel %vm158, %v1153, %v1147
  %1158 = vst [vmem:[#allocation2 + $0x40] sm:$0xf] %v1156
  %1159 = vst [vmem:[#allocation2 + $0x48] sm:$0xf] %v1155
  %1160 = vst [vmem:[#allocation2 + $0x50] sm:$0xf] %v1154
  %1161 = vst [vmem:[#allocation2 + $0x58] sm:$0xf] %v1157
  %1162 = vrot.lane.b32.xlu0 %v1122, 112
  %v1163 = vpop.permute.xlu0 %1162
  %1164 = vrot.lane.b32.xlu0 %v1123, 112
  %v1165 = vpop.permute.xlu0 %1164
  %1166 = vrot.lane.b32.xlu0 %v1124, 112
  %v1167 = vpop.permute.xlu0 %1166
  %1168 = vrot.lane.b32.xlu0 %v1125, 112
  %v1169 = vpop.permute.xlu0 %1168
  %v1170 = vsel %vm203, %v1167, %v1169
  %v1171 = vsel %vm203, %v1165, %v1167
  %v1172 = vsel %vm203, %v1163, %v1165
  %v1173 = vsel %vm203, %v1169, %v1163
  %1174 = vst [vmem:[#allocation2 + $0x60] sm:$0xf] %v1172
  %1175 = vst [vmem:[#allocation2 + $0x68] sm:$0xf] %v1171
  %1176 = vst [vmem:[#allocation2 + $0x70] sm:$0xf] %v1170
  %1177 = vst [vmem:[#allocation2 + $0x78] sm:$0xf] %v1173
  %1178 = vrot.lane.b32.xlu0 %v1122, 111
  %v1179 = vpop.permute.xlu0 %1178
  %1180 = vrot.lane.b32.xlu0 %v1123, 111
  %v1181 = vpop.permute.xlu0 %1180
  %1182 = vrot.lane.b32.xlu0 %v1124, 111
  %v1183 = vpop.permute.xlu0 %1182
  %1184 = vrot.lane.b32.xlu0 %v1125, 111
  %v1185 = vpop.permute.xlu0 %1184
  %v1186 = vsel %vm248, %v1183, %v1185
  %v1187 = vsel %vm248, %v1181, %v1183
  %v1188 = vsel %vm248, %v1179, %v1181
  %v1189 = vsel %vm248, %v1185, %v1179
  %1190 = vst [vmem:[#allocation2 + $0x80] sm:$0xf] %v1188
  %1191 = vst [vmem:[#allocation2 + $0x88] sm:$0xf] %v1187
  %1192 = vst [vmem:[#allocation2 + $0x90] sm:$0xf] %v1186
  %1193 = vst [vmem:[#allocation2 + $0x98] sm:$0xf] %v1189
  %1194 = vrot.lane.b32.xlu0 %v1122, 110
  %v1195 = vpop.permute.xlu0 %1194
  %1196 = vrot.lane.b32.xlu0 %v1123, 110
  %v1197 = vpop.permute.xlu0 %1196
  %1198 = vrot.lane.b32.xlu0 %v1124, 110
  %v1199 = vpop.permute.xlu0 %1198
  %1200 = vrot.lane.b32.xlu0 %v1125, 110
  %v1201 = vpop.permute.xlu0 %1200
  %v1202 = vsel %vm293, %v1199, %v1201
  %v1203 = vsel %vm293, %v1197, %v1199
  %v1204 = vsel %vm293, %v1195, %v1197
  %v1205 = vsel %vm293, %v1201, %v1195
  %1206 = vst [vmem:[#allocation2 + $0xa0] sm:$0xf] %v1204
  %1207 = vst [vmem:[#allocation2 + $0xa8] sm:$0xf] %v1203
  %1208 = vst [vmem:[#allocation2 + $0xb0] sm:$0xf] %v1202
  %1209 = vst [vmem:[#allocation2 + $0xb8] sm:$0xf] %v1205
  %1210 = vrot.lane.b32.xlu0 %v1122, 96
  %v1211 = vpop.permute.xlu0 %1210
  %1212 = vrot.lane.b32.xlu0 %v1123, 96
  %v1213 = vpop.permute.xlu0 %1212
  %1214 = vrot.lane.b32.xlu0 %v1124, 96
  %v1215 = vpop.permute.xlu0 %1214
  %1216 = vrot.lane.b32.xlu0 %v1125, 96
  %v1217 = vpop.permute.xlu0 %1216
  %v1218 = vsel %vm338, %v1215, %v1217
  %v1219 = vsel %vm338, %v1213, %v1215
  %v1220 = vsel %vm338, %v1211, %v1213
  %v1221 = vsel %vm338, %v1217, %v1211
  %1222 = vst [vmem:[#allocation2 + $0xc0] sm:$0xf] %v1220
  %1223 = vst [vmem:[#allocation2 + $0xc8] sm:$0xf] %v1219
  %1224 = vst [vmem:[#allocation2 + $0xd0] sm:$0xf] %v1218
  %1225 = vst [vmem:[#allocation2 + $0xd8] sm:$0xf] %v1221
  %1226 = vrot.lane.b32.xlu0 %v1122, 95
  %v1227 = vpop.permute.xlu0 %1226
  %1228 = vrot.lane.b32.xlu0 %v1123, 95
  %v1229 = vpop.permute.xlu0 %1228
  %1230 = vrot.lane.b32.xlu0 %v1124, 95
  %v1231 = vpop.permute.xlu0 %1230
  %1232 = vrot.lane.b32.xlu0 %v1125, 95
  %v1233 = vpop.permute.xlu0 %1232
  %v1234 = vsel %vm383, %v1231, %v1233
  %v1235 = vsel %vm383, %v1229, %v1231
  %v1236 = vsel %vm383, %v1227, %v1229
  %v1237 = vsel %vm383, %v1233, %v1227
  %1238 = vst [vmem:[#allocation2 + $0xe0] sm:$0xf] %v1236
  %1239 = vst [vmem:[#allocation2 + $0xe8] sm:$0xf] %v1235
  %1240 = vst [vmem:[#allocation2 + $0xf0] sm:$0xf] %v1234
  %1241 = vst [vmem:[#allocation2 + $0xf8] sm:$0xf] %v1237
  %1242 = vrot.lane.b32.xlu0 %v1122, 94
  %v1243 = vpop.permute.xlu0 %1242
  %1244 = vrot.lane.b32.xlu0 %v1123, 94
  %v1245 = vpop.permute.xlu0 %1244
  %1246 = vrot.lane.b32.xlu0 %v1124, 94
  %v1247 = vpop.permute.xlu0 %1246
  %1248 = vrot.lane.b32.xlu0 %v1125, 94
  %v1249 = vpop.permute.xlu0 %1248
  %v1250 = vsel %vm428, %v1247, %v1249
  %v1251 = vsel %vm428, %v1245, %v1247
  %v1252 = vsel %vm428, %v1243, %v1245
  %v1253 = vsel %vm428, %v1249, %v1243
  %1254 = vst [vmem:[#allocation2 + $0x100] sm:$0xf] %v1252
  %1255 = vst [vmem:[#allocation2 + $0x108] sm:$0xf] %v1251
  %1256 = vst [vmem:[#allocation2 + $0x110] sm:$0xf] %v1250
  %1257 = vst [vmem:[#allocation2 + $0x118] sm:$0xf] %v1253
  %v1258 = vld [vmem:[%s7] sm:$0xff]
  %v1259 = vld [vmem:[#allocation2] sm:$0xff]
  %v1260 = vld [vmem:[#allocation2 + $0x8] sm:$0xff]
  %v1261 = vld [vmem:[#allocation2 + $0x10] sm:$0xff]
  %v1262 = vld [vmem:[#allocation2 + $0x18] sm:$0xff]
  %v1263 = vld [vmem:[#allocation2 + $0x20] sm:$0xff]
  %v1264 = vld [vmem:[#allocation2 + $0x28] sm:$0xff]
  %v1265 = vld [vmem:[#allocation2 + $0x30] sm:$0xff]
  %v1266 = vld [vmem:[#allocation2 + $0x38] sm:$0xff]
  %v1267 = vld [vmem:[#allocation2 + $0x40] sm:$0xff]
  %v1268 = vld [vmem:[#allocation2 + $0x48] sm:$0xff]
  %v1269 = vld [vmem:[#allocation2 + $0x50] sm:$0xff]
  %v1270 = vld [vmem:[#allocation2 + $0x58] sm:$0xff]
  %v1271 = vld [vmem:[#allocation2 + $0x60] sm:$0xff]
  %v1272 = vld [vmem:[#allocation2 + $0x68] sm:$0xff]
  %v1273 = vld [vmem:[#allocation2 + $0x70] sm:$0xff]
  %v1274 = vld [vmem:[#allocation2 + $0x78] sm:$0xff]
  %v1275 = vld [vmem:[#allocation2 + $0x80] sm:$0xff]
  %v1276 = vld [vmem:[#allocation2 + $0x88] sm:$0xff]
  %v1277 = vld [vmem:[#allocation2 + $0x90] sm:$0xff]
  %v1278 = vld [vmem:[#allocation2 + $0x98] sm:$0xff]
  %v1279 = vld [vmem:[#allocation2 + $0xa0] sm:$0xff]
  %v1280 = vld [vmem:[#allocation2 + $0xa8] sm:$0xff]
  %v1281 = vld [vmem:[#allocation2 + $0xb0] sm:$0xff]
  %v1282 = vld [vmem:[#allocation2 + $0xb8] sm:$0xff]
  %v1283 = vld [vmem:[#allocation2 + $0xc0] sm:$0xff]
  %v1284 = vld [vmem:[#allocation2 + $0xc8] sm:$0xff]
  %v1285 = vld [vmem:[#allocation2 + $0xd0] sm:$0xff]
  %v1286 = vld [vmem:[#allocation2 + $0xd8] sm:$0xff]
  %v1287 = vld [vmem:[#allocation2 + $0xe0] sm:$0xff]
  %v1288 = vld [vmem:[#allocation2 + $0xe8] sm:$0xff]
  %v1289 = vld [vmem:[#allocation2 + $0xf0] sm:$0xff]
  %v1290 = vld [vmem:[#allocation2 + $0xf8] sm:$0xff]
  %v1291 = vld [vmem:[#allocation2 + $0x100] sm:$0xff]
  %v1292 = vld [vmem:[#allocation2 + $0x108] sm:$0xff]
  %v1293 = vld [vmem:[#allocation2 + $0x110] sm:$0xff]
  %v1294 = vld [vmem:[#allocation2 + $0x118] sm:$0xff]
  %v1295 = vld [vmem:[#allocation2 + $0x120] sm:$0xff]
  %v1296 = vld [vmem:[#allocation2 + $0x128] sm:$0xff]
  %v1297 = vld [vmem:[#allocation2 + $0x130] sm:$0xff]
  %v1298 = vld [vmem:[#allocation2 + $0x138] sm:$0xff]
  %v1300 = vsel %vm506, %v1258, 0
  %1302 = vmatprep.subr.mxu0 0.0
  %1303 = vmatpush1.msra.mxu0 0.0
  %1304 = vmatprep.subr.mxu0 0.0
  %1305 = vmatpush1.msra.mxu0 0.0
  %1306 = vmatprep.subr.mxu0 0.0
  %1307 = vmatpush1.msra.mxu0 0.0
  %1308 = vmatprep.subr.mxu0 0.0
  %1309 = vmatpush1.msra.mxu0 0.0
  %1310 = vmatprep.subr.mxu0 0.0
  %1311 = vmatpush1.msra.mxu0 0.0
  %1312 = vmatprep.subr.mxu0 0.0
  %1313 = vmatpush1.msra.mxu0 0.0
  %1314 = vmatprep.subr.mxu0 %v1296
  %1315 = vmatpush1.msra.mxu0 %v1295
  %1316 = vmatprep.subr.mxu0 %v1292
  %1317 = vmatpush1.msra.mxu0 %v1291
  %1318 = vmatprep.subr.mxu0 %v1288
  %1319 = vmatpush1.msra.mxu0 %v1287
  %1320 = vmatprep.subr.mxu0 %v1284
  %1321 = vmatpush1.msra.mxu0 %v1283
  %1322 = vmatprep.subr.mxu0 %v1280
  %1323 = vmatpush1.msra.mxu0 %v1279
  %1324 = vmatprep.subr.mxu0 %v1276
  %1325 = vmatpush1.msra.mxu0 %v1275
  %1326 = vmatprep.subr.mxu0 %v1272
  %1327 = vmatpush1.msra.mxu0 %v1271
  %1328 = vmatprep.subr.mxu0 %v1268
  %1329 = vmatpush1.msra.mxu0 %v1267
  %1330 = vmatprep.subr.mxu0 %v1264
  %1331 = vmatpush1.msra.mxu0 %v1263
  %1332 = vmatprep.subr.mxu0 %v1260
  %1333 = vmatpush1.msra.mxu0 %v1259
  %1334 = vmatprep.subr.mxu0 0.0
  %1335 = vmatpush2.msra.mxu0 0.0
  %1336 = vmatprep.subr.mxu0 0.0
  %1337 = vmatpush2.msra.mxu0 0.0
  %1338 = vmatprep.subr.mxu0 0.0
  %1339 = vmatpush2.msra.mxu0 0.0
  %1340 = vmatprep.subr.mxu0 0.0
  %1341 = vmatpush2.msra.mxu0 0.0
  %1342 = vmatprep.subr.mxu0 0.0
  %1343 = vmatpush2.msra.mxu0 0.0
  %1344 = vmatprep.subr.mxu0 0.0
  %1345 = vmatpush2.msra.mxu0 0.0
  %1346 = vmatprep.subr.mxu0 0.0
  %1347 = vmatpush2.msra.mxu0 0.0
  %1348 = vmatprep.subr.mxu0 0.0
  %1349 = vmatpush2.msra.mxu0 0.0
  %1350 = vmatprep.subr.mxu0 0.0
  %1351 = vmatpush2.msra.mxu0 0.0
  %1352 = vmatprep.subr.mxu0 0.0
  %1353 = vmatpush2.msra.mxu0 0.0
  %1354 = vmatprep.subr.mxu0 0.0
  %1355 = vmatpush2.msra.mxu0 0.0
  %1356 = vmatprep.subr.mxu0 0.0
  %1357 = vmatpush2.msra.mxu0 0.0
  %1358 = vmatprep.subr.mxu0 0.0
  %1359 = vmatpush2.msra.mxu0 0.0
  %1360 = vmatprep.subr.mxu0 0.0
  %1361 = vmatpush2.msra.mxu0 0.0
  %1362 = vmatprep.subr.mxu0 0.0
  %1363 = vmatpush2.msra.mxu0 0.0
  %1364 = vmatprep.subr.mxu0 0.0
  %1365 = vmatpush2.msra.mxu0 0.0
  %1366 = vmatprep.mubr.f32.mxu0 0.0
  %1367 = vmatmul.mubr.f32.gmra.mxu0 %v1300
  %v1368 = vpop.f32.mrf.mxu0
  %v1369 = vadd.f32 0.0, %v1368
  %v1370 = vpop.f32.mrf.mxu0
  %v1371 = vadd.f32 0.0, %v1370
  %1372 = vdwg.mxu0
  %1373 = vmatprep.subr.mxu0 0.0
  %1374 = vmatpush1.msra.mxu0 0.0
  %1375 = vmatprep.subr.mxu0 0.0
  %1376 = vmatpush1.msra.mxu0 0.0
  %1377 = vmatprep.subr.mxu0 0.0
  %1378 = vmatpush1.msra.mxu0 0.0
  %1379 = vmatprep.subr.mxu0 0.0
  %1380 = vmatpush1.msra.mxu0 0.0
  %1381 = vmatprep.subr.mxu0 0.0
  %1382 = vmatpush1.msra.mxu0 0.0
  %1383 = vmatprep.subr.mxu0 0.0
  %1384 = vmatpush1.msra.mxu0 0.0
  %1385 = vmatprep.subr.mxu0 %v1298
  %1386 = vmatpush1.msra.mxu0 %v1297
  %1387 = vmatprep.subr.mxu0 %v1294
  %1388 = vmatpush1.msra.mxu0 %v1293
  %1389 = vmatprep.subr.mxu0 %v1290
  %1390 = vmatpush1.msra.mxu0 %v1289
  %1391 = vmatprep.subr.mxu0 %v1286
  %1392 = vmatpush1.msra.mxu0 %v1285
  %1393 = vmatprep.subr.mxu0 %v1282
  %1394 = vmatpush1.msra.mxu0 %v1281
  %1395 = vmatprep.subr.mxu0 %v1278
  %1396 = vmatpush1.msra.mxu0 %v1277
  %1397 = vmatprep.subr.mxu0 %v1274
  %1398 = vmatpush1.msra.mxu0 %v1273
  %1399 = vmatprep.subr.mxu0 %v1270
  %1400 = vmatpush1.msra.mxu0 %v1269
  %1401 = vmatprep.subr.mxu0 %v1266
  %1402 = vmatpush1.msra.mxu0 %v1265
  %1403 = vmatprep.subr.mxu0 %v1262
  %1404 = vmatpush1.msra.mxu0 %v1261
  %1405 = vmatprep.subr.mxu0 0.0
  %1406 = vmatpush2.msra.mxu0 0.0
  %1407 = vmatprep.subr.mxu0 0.0
  %1408 = vmatpush2.msra.mxu0 0.0
  %1409 = vmatprep.subr.mxu0 0.0
  %1410 = vmatpush2.msra.mxu0 0.0
  %1411 = vmatprep.subr.mxu0 0.0
  %1412 = vmatpush2.msra.mxu0 0.0
  %1413 = vmatprep.subr.mxu0 0.0
  %1414 = vmatpush2.msra.mxu0 0.0
  %1415 = vmatprep.subr.mxu0 0.0
  %1416 = vmatpush2.msra.mxu0 0.0
  %1417 = vmatprep.subr.mxu0 0.0
  %1418 = vmatpush2.msra.mxu0 0.0
  %1419 = vmatprep.subr.mxu0 0.0
  %1420 = vmatpush2.msra.mxu0 0.0
  %1421 = vmatprep.subr.mxu0 0.0
  %1422 = vmatpush2.msra.mxu0 0.0
  %1423 = vmatprep.subr.mxu0 0.0
  %1424 = vmatpush2.msra.mxu0 0.0
  %1425 = vmatprep.subr.mxu0 0.0
  %1426 = vmatpush2.msra.mxu0 0.0
  %1427 = vmatprep.subr.mxu0 0.0
  %1428 = vmatpush2.msra.mxu0 0.0
  %1429 = vmatprep.subr.mxu0 0.0
  %1430 = vmatpush2.msra.mxu0 0.0
  %1431 = vmatprep.subr.mxu0 0.0
  %1432 = vmatpush2.msra.mxu0 0.0
  %1433 = vmatprep.subr.mxu0 0.0
  %1434 = vmatpush2.msra.mxu0 0.0
  %1435 = vmatprep.subr.mxu0 0.0
  %1436 = vmatpush2.msra.mxu0 0.0
  %1437 = vmatprep.mubr.f32.mxu0 0.0
  %1438 = vmatmul.mubr.f32.gmra.mxu0 %v1300
  %v1439 = vpop.f32.mrf.mxu0
  %v1440 = vadd.f32 0.0, %v1439
  %v1441 = vpop.f32.mrf.mxu0
  %v1442 = vadd.f32 0.0, %v1441
  %1443 = vdwg.mxu0
  %v1444 = vld [vmem:[%s4] sm:$0xff]
  %v1445 = vld [vmem:[%s4 + $0x8] sm:$0xff]
  %v1446 = vld [vmem:[%s8 + $0x10] sm:$0xf]
  %1448 = vset.pattern.permute.xlu0 0
  %1449 = vperm.xlu0 %1448, %v1446
  %v1450 = vpop.permute.xlu0 %1449
  %v1456 = vrot.slane %v1369, 4
  %v1457 = vrot.slane %v1371, 4
  %v1458 = vrot.slane %v1440, 4
  %v1459 = vrot.slane %v1442, 4
  %v1464 = vsub.f32 %v1450, %v1456
  %v1465 = vsub.f32 %v1450, %v1457
  %v1466 = vsub.f32 %v1450, %v1458
  %v1467 = vsub.f32 %v1450, %v1459
  %v1470 = vcombine.high %v1444, %v1444
  %v1471 = vcombine.high %v1445, %v1445
  %v1474 = vmul.f32 %v1464, %v1444
  %v1475 = vmul.f32 %v1465, %v1470
  %v1476 = vmul.f32 %v1466, %v1445
  %v1477 = vmul.f32 %v1467, %v1471
  %v1478 = vadd.f32 %v1369, %v1474
  %v1479 = vadd.f32 %v1371, %v1475
  %v1480 = vadd.f32 %v1440, %v1476
  %v1481 = vadd.f32 %v1442, %v1477
  %v1482 = vmax.f32 %v1478, 0.0
  %v1483 = vmax.f32 %v1479, 0.0
  %v1484 = vmax.f32 %v1480, 0.0
  %v1485 = vmax.f32 %v1481, 0.0
  %v1486 = vmin.f32 %v1482, 1.0
  %v1487 = vmin.f32 %v1483, 1.0
  %v1488 = vmin.f32 %v1484, 1.0
  %v1489 = vmin.f32 %v1485, 1.0
  %v1494 = vrot.slane %v686, 4
  %v1495 = vrot.slane %v687, 4
  %v1496 = vrot.slane %v688, 4
  %v1497 = vrot.slane %v689, 4
  %v1506 = vrot.slane %v732, 2
  %v1507 = vrot.slane %v733, 2
  %v1508 = vrot.slane %v734, 2
  %v1509 = vrot.slane %v735, 2
  %v1518 = vrot.slane %v1478, 4
  %v1519 = vrot.slane %v1479, 4
  %v1520 = vrot.slane %v1480, 4
  %v1521 = vrot.slane %v1481, 4
  %vm1526 = vcmask 1043456
  %v1527 = vsel %vm1526, %v1486, %v1494
  %v1528 = vsel %vm1526, %v1487, %v1495
  %v1529 = vsel %vm1526, %v1488, %v1496
  %v1530 = vsel %vm1526, %v1489, %v1497
  %vm1531 = vcmask 1045504
  %v1532 = vsel %vm1531, %v1527, %v1506
  %v1533 = vsel %vm1531, %v1528, %v1507
  %v1534 = vsel %vm1531, %v1529, %v1508
  %v1535 = vsel %vm1531, %v1530, %v1509
  %v1536 = vsel %vm1526, %v1114, %v1518
  %v1537 = vsel %vm1526, %v1115, %v1519
  %v1538 = vsel %vm1526, %v1116, %v1520
  %v1539 = vsel %vm1526, %v1117, %v1521
  %1540 = vst [vmem:[%s9] sm:$0xff] %v1532
  %1541 = vst [vmem:[%s9 + $0x8] sm:$0xff] %v1533
  %1542 = vst [vmem:[%s9 + $0x10] sm:$0xff] %v1534
  %1543 = vst [vmem:[%s9 + $0x18] sm:$0xff] %v1535
  %1544 = vst [vmem:[%s9 + $0x20] sm:$0xff] %v1536
  %1545 = vst [vmem:[%s9 + $0x28] sm:$0xff] %v1537
  %1546 = vst [vmem:[%s9 + $0x30] sm:$0xff] %v1538
  %1547 = vst [vmem:[%s9 + $0x38] sm:$0xff] %v1539
  // Predicated region
  $region38: #{motionnet_forward.1} parent=0 // pred_check
    _
  $region39: #{motionnet_forward.1} parent=0 // pred_check_branch
    %1549 = sbr.rel (0) target = $region41
  $region40: #{motionnet_forward.1} parent=0 // pred_region
    _
  $region41: #{motionnet_forward.1} parent=0 // pred_fallthru
    _
  // Predicated region
  $region42: #{motionnet_forward.1} parent=0 // pred_check
    _
  $region43: #{motionnet_forward.1} parent=0 // pred_check_branch
    %1551 = sbr.rel (0) target = $region45
  $region44: #{motionnet_forward.1} parent=0 // pred_region
    _
  $region45: #{motionnet_forward.1} parent=0 // pred_fallthru
    _

</llo_original>
